<compile_context>
chip_gen: v7x
topology: tpu7x:2x2x1
jax: 0.10.0
libtpu: 0.0.40
codegen_flags: <defaults>
</compile_context>

<pallas_src>
import numpy as np
import jax
import jax.numpy as jnp
from jax import lax
from jax.experimental import pallas as pl
from jax.experimental.pallas import tpu as pltpu

EPS = 1e-12


# ----------------------------------------------------------------------------- kernels

def _filter_layer_lanes_kernel(x_ref, cs_ref, dr_ref, di_ref, wr_ref, wi_ref,
                               e_ref, et_ref, gamma_ref, beta_ref, o_ref):
    x = x_ref[...]                                   # (S, BH)  batch folded into lanes
    fp = wr_ref.shape[0]

    # Stacked rfft along seq (ortho): z = [Xr; Xi]  (padded freq rows of Cs are zero)
    z = jnp.dot(cs_ref[...], x, preferred_element_type=jnp.float32)   # (2Fp, BH)
    xr = z[:fp]
    xi = z[fp:]

    # Complex elementwise multiply with the learnable filter (padded rows are zero).
    wr = wr_ref[...]
    wi = wi_ref[...]
    yr = xr * wr - xi * wi
    yi = xr * wi + xi * wr

    # irfft as a K-split (no concat temporary): filt = Dr @ yr + Di @ yi
    filt = (jnp.dot(dr_ref[...], yr, preferred_element_type=jnp.float32)
            + jnp.dot(di_ref[...], yi, preferred_element_type=jnp.float32))

    # dropout (eval) == identity; residual + TF-style LayerNorm over the hidden dim.
    # Per-(batch, seq) stats over each H-lane group via factored matmuls:
    #   E  (BH, G): E[l, l//H]   = 1/H  -> group means
    #   E^T(G, BH): Et[g, g*H+j] = 1    -> broadcast back to lanes
    h = filt + x
    e = e_ref[...]
    et = et_ref[...]
    u = jnp.dot(jnp.dot(h, e, preferred_element_type=jnp.float32), et,
                preferred_element_type=jnp.float32)
    d = h - u
    s2 = jnp.dot(jnp.dot(d * d, e, preferred_element_type=jnp.float32), et,
                 preferred_element_type=jnp.float32)
    o_ref[...] = gamma_ref[...] * (d * lax.rsqrt(s2 + EPS)) + beta_ref[...]


def _filter_layer_native_kernel(x_ref, cs_ref, dr_ref, di_ref, wr_ref, wi_ref,
                                gamma_ref, beta_ref, o_ref):
    x = x_ref[...]                                   # (S, H)  one batch element (squeezed)
    fp = wr_ref.shape[0]

    z = jnp.dot(cs_ref[...], x, preferred_element_type=jnp.float32)   # (2Fp, H)
    xr = z[:fp]
    xi = z[fp:]

    wr = wr_ref[...]
    wi = wi_ref[...]
    yr = xr * wr - xi * wi
    yi = xr * wi + xi * wr

    filt = (jnp.dot(dr_ref[...], yr, preferred_element_type=jnp.float32)
            + jnp.dot(di_ref[...], yi, preferred_element_type=jnp.float32))

    h = filt + x
    u = jnp.mean(h, axis=-1, keepdims=True)          # full-lane reduce: XLU
    d = h - u
    s2 = jnp.mean(d * d, axis=-1, keepdims=True)
    o_ref[...] = gamma_ref[...] * (d * lax.rsqrt(s2 + EPS)) + beta_ref[...]


# ----------------------------------------------------------------------------- helpers

def make_dft_matrices(seq_len, f_pad):
    """Stacked rfft matrix Cs=(2Fp,S) and split irfft matrices Dr,Di=(S,Fp), ortho norm,
    frequency axis zero-padded to f_pad (multiple of 8)."""
    n = seq_len
    f = n // 2 + 1
    k = np.arange(f)[:, None]
    t = np.arange(n)[None, :]
    ang = 2.0 * np.pi * k * t / n
    scale = 1.0 / np.sqrt(n)

    cr = np.zeros((f_pad, n), dtype=np.float32)
    ci = np.zeros((f_pad, n), dtype=np.float32)
    cr[:f] = np.cos(ang) * scale
    ci[:f] = -np.sin(ang) * scale
    cs = np.concatenate([cr, ci], axis=0)            # (2Fp, S)

    # irfft (ortho): x[t] = scale * sum_k c_k (Yr[k] cos - Yi[k] sin), Hermitian fold in c_k
    c = np.full((f,), 2.0, dtype=np.float32)
    c[0] = 1.0
    if n % 2 == 0:
        c[-1] = 1.0
    ang_i = 2.0 * np.pi * np.arange(n)[:, None] * np.arange(f)[None, :] / n   # (S, F)
    dr = np.zeros((n, f_pad), dtype=np.float32)
    di = np.zeros((n, f_pad), dtype=np.float32)
    dr[:, :f] = np.cos(ang_i) * c[None, :] * scale
    di[:, :f] = -np.sin(ang_i) * c[None, :] * scale
    return jnp.asarray(cs), jnp.asarray(dr), jnp.asarray(di)


def _vmem_capacity_bytes():
    try:
        return int(pltpu.get_tpu_info().vmem_capacity_bytes)
    except Exception:
        return 64 * 1024 * 1024          # conservative (v7x-sized) fallback


def _num_tensorcores():
    try:
        info = pltpu.get_tpu_info()
        for attr in ("num_cores", "num_tensorcores", "core_count"):
            v = getattr(info, attr, None)
            if v:
                return int(v)
    except Exception:
        pass
    try:
        d = jax.devices()[0]
        for attr in ("num_cores", "core_count"):
            v = getattr(d, attr, None)
            if v:
                return int(v)
    except Exception:
        pass
    return 1


def _block_bytes(b_blk, S, H, fp):
    """Upper bound on per-step VMEM for the lane-folded kernel."""
    BH = b_blk * H
    io = 2 * 2 * S * BH * 4                                        # double-buffered x & out
    inv = 4 * (2 * fp * S + 2 * S * fp + 2 * fp * BH + 2 * b_blk * BH + 2 * BH)
    inter = (8 * S + 6 * fp) * BH * 4                              # live f32 temporaries
    return io + inv + inter


def _choose_batch_block(B, S, H, fp, vmem_budget, prefer_split):
    """Largest legal batch block (BH % 128 == 0 or block == full lane extent) fitting VMEM."""
    divisors = [d for d in range(1, B + 1) if B % d == 0]
    legal = [d for d in divisors if d == B or (d * H) % 128 == 0]
    fitting = [d for d in legal if _block_bytes(d, S, H, fp) <= vmem_budget]
    if not fitting:
        fitting = [min(legal)]                                     # smallest legal; may spill
    if prefer_split:                                               # keep >=2 grid steps for 2-TC chips
        split = [d for d in fitting if B // d >= 2]
        if split:
            best = max(split)
            return best, _block_bytes(best, S, H, fp)
    best = max(fitting)
    return best, _block_bytes(best, S, H, fp)


# ----------------------------------------------------------------------------- wrappers

def _filter_layer_lanes(x, cs, dr, di, wr, wi, gamma, beta, vmem_cap):
    """H not a multiple of 128: fold batch into lanes so stores stay lane-dense."""
    B, S, H = x.shape
    Fp = wr.shape[0]
    prefer_split = _num_tensorcores() >= 2
    b_blk, need = _choose_batch_block(B, S, H, Fp, int(0.6 * vmem_cap), prefer_split)
    nb = B // b_blk
    G = b_blk
    BH = b_blk * H

    wr_t = jnp.tile(wr, (1, b_blk))                                # (Fp, BH)
    wi_t = jnp.tile(wi, (1, b_blk))
    gamma_t = jnp.tile(gamma, (1, b_blk))                          # (1, BH)
    beta_t = jnp.tile(beta, (1, b_blk))

    eye_g = np.eye(G, dtype=np.float32)
    e = jnp.asarray(np.kron(eye_g, np.full((H, 1), 1.0 / H, dtype=np.float32)))   # (BH, G)
    et = jnp.asarray(np.kron(eye_g, np.ones((1, H), dtype=np.float32)))           # (G, BH)

    # Fold batch into the lane (N) dimension: (B, S, H) -> (S, B*H).
    x2 = jnp.transpose(x, (1, 0, 2)).reshape(S, B * H)

    macs = nb * (2 * Fp * S * BH + 2 * S * Fp * BH + 4 * S * BH * G)
    bytes_accessed = 4 * (2 * B * S * H + 2 * Fp * S + 2 * S * Fp + 2 * Fp * BH
                          + 2 * G * BH + 2 * BH)
    cost = pl.CostEstimate(flops=2 * macs, transcendentals=nb * S * BH,
                           bytes_accessed=bytes_accessed)
    vmem_limit = int(min(0.9 * vmem_cap, max(2 * need + (8 << 20), 32 << 20)))

    def build(single_buffer_invariants):
        def inv_spec(shape):
            idx = lambda b, _s=shape: (0,) * len(_s)
            if single_buffer_invariants:
                return pl.BlockSpec(shape, idx, pipeline_mode=pl.Buffered(1))
            return pl.BlockSpec(shape, idx)

        return pl.pallas_call(
            _filter_layer_lanes_kernel,
            out_shape=jax.ShapeDtypeStruct((S, B * H), jnp.float32),
            grid_spec=pltpu.PrefetchScalarGridSpec(
                num_scalar_prefetch=0,
                grid=(nb,),
                in_specs=[
                    pl.BlockSpec((S, BH), lambda b: (0, b)),       # x (batch-block of lanes)
                    inv_spec((2 * Fp, S)),                         # Cs
                    inv_spec((S, Fp)),                             # Dr
                    inv_spec((S, Fp)),                             # Di
                    inv_spec((Fp, BH)),                            # wr
                    inv_spec((Fp, BH)),                            # wi
                    inv_spec((BH, G)),                             # E   (LN averaging)
                    inv_spec((G, BH)),                             # E^T (LN broadcast)
                    inv_spec((1, BH)),                             # gamma
                    inv_spec((1, BH)),                             # beta
                ],
                out_specs=pl.BlockSpec((S, BH), lambda b: (0, b)),
            ),
            compiler_params=pltpu.CompilerParams(
                dimension_semantics=("parallel",),
                vmem_limit_bytes=vmem_limit),
            cost_estimate=cost,
        )

    args = (x2, cs, dr, di, wr_t, wi_t, e, et, gamma_t, beta_t)
    try:
        out2 = build(True)(*args)
    except Exception:
        # pipeline_mode / Buffered(1) unsupported on this jax version -> default buffering.
        out2 = build(False)(*args)

    return jnp.transpose(out2.reshape(S, B, H), (1, 0, 2))


def _filter_layer_native(x, cs, dr, di, wr, wi, gamma, beta, vmem_cap):
    """H % 128 == 0: native (B, S, H) layout, no wrapper transposes, grid over batch."""
    B, S, H = x.shape
    Fp = wr.shape[0]
    need = (2 * 2 * S * H + (8 * S + 6 * Fp) * H
            + 2 * Fp * S + 2 * S * Fp + 2 * Fp * H + 2 * H) * 4
    vmem_limit = int(min(0.9 * vmem_cap, max(2 * need + (8 << 20), 32 << 20)))

    macs = B * (2 * Fp * S * H + 2 * S * Fp * H)
    bytes_accessed = 4 * (2 * B * S * H + 2 * Fp * S + 2 * S * Fp + 2 * Fp * H + 2 * H)
    cost = pl.CostEstimate(flops=2 * macs, transcendentals=B * S * H,
                           bytes_accessed=bytes_accessed)

    def build(single_buffer_invariants):
        def inv_spec(shape):
            idx = lambda b, _s=shape: (0,) * len(_s)
            if single_buffer_invariants:
                return pl.BlockSpec(shape, idx, pipeline_mode=pl.Buffered(1))
            return pl.BlockSpec(shape, idx)

        return pl.pallas_call(
            _filter_layer_native_kernel,
            out_shape=jax.ShapeDtypeStruct((B, S, H), jnp.float32),
            grid_spec=pltpu.PrefetchScalarGridSpec(
                num_scalar_prefetch=0,
                grid=(B,),
                in_specs=[
                    pl.BlockSpec((None, S, H), lambda b: (b, 0, 0)),   # x (squeezed batch)
                    inv_spec((2 * Fp, S)),                             # Cs
                    inv_spec((S, Fp)),                                 # Dr
                    inv_spec((S, Fp)),                                 # Di
                    inv_spec((Fp, H)),                                 # wr
                    inv_spec((Fp, H)),                                 # wi
                    inv_spec((1, H)),                                  # gamma
                    inv_spec((1, H)),                                  # beta
                ],
                out_specs=pl.BlockSpec((None, S, H), lambda b: (b, 0, 0)),
            ),
            compiler_params=pltpu.CompilerParams(
                dimension_semantics=("parallel",),
                vmem_limit_bytes=vmem_limit),
            cost_estimate=cost,
        )

    args = (x, cs, dr, di, wr, wi, gamma, beta)
    try:
        return build(True)(*args)
    except Exception:
        return build(False)(*args)


def filter_layer(x, complex_weight, ln_weight, ln_bias):
    """x: (B, S, H) float32. complex_weight: (1, S//2+1, H, 2). Eval mode (no dropout)."""
    B, S, H = x.shape
    Fq = S // 2 + 1
    Fp = ((Fq + 7) // 8) * 8                         # sublane-aligned frequency count
    cs, dr, di = make_dft_matrices(S, Fp)

    wr = jnp.pad(complex_weight[0, :, :, 0], ((0, Fp - Fq), (0, 0)))   # (Fp, H)
    wi = jnp.pad(complex_weight[0, :, :, 1], ((0, Fp - Fq), (0, 0)))   # (Fp, H)
    gamma = ln_weight.reshape(1, H).astype(jnp.float32)
    beta = ln_bias.reshape(1, H).astype(jnp.float32)

    cap = _vmem_capacity_bytes()
    if H % 128 == 0:
        return _filter_layer_native(x, cs, dr, di, wr, wi, gamma, beta, cap)
    return _filter_layer_lanes(x, cs, dr, di, wr, wi, gamma, beta, cap)


# ----------------------------------------------------------------------------- reference

def filter_layer_ref(x, complex_weight, ln_weight, ln_bias):
    """Pure-JAX reference using jnp.fft, mirroring the PyTorch forward (eval mode)."""
    B, S, H = x.shape
    xf = jnp.fft.rfft(x, axis=1, norm="ortho")
    w = complex_weight[..., 0] + 1j * complex_weight[..., 1]   # (1, F, H)
    y = jnp.fft.irfft(xf * w, n=S, axis=1, norm="ortho")
    h = y + x
    u = jnp.mean(h, axis=-1, keepdims=True)
    s = jnp.mean((h - u) ** 2, axis=-1, keepdims=True)
    return ln_weight * (h - u) / jnp.sqrt(s + EPS) + ln_bias


if __name__ == "__main__":
    def run_case(B, S, H):
        F = S // 2 + 1
        key = jax.random.PRNGKey(0)
        kx, kw = jax.random.split(key)
        x = jax.random.normal(kx, (B, S, H), dtype=jnp.float32)
        complex_weight = jax.random.normal(kw, (1, F, H, 2), dtype=jnp.float32) * 0.02
        ln_weight = jnp.ones((H,), dtype=jnp.float32)
        ln_bias = jnp.zeros((H,), dtype=jnp.float32)

        out = jax.block_until_ready(filter_layer(x, complex_weight, ln_weight, ln_bias))
        ref = jax.block_until_ready(filter_layer_ref(x, complex_weight, ln_weight, ln_bias))
        assert out.shape == (B, S, H)
        np.testing.assert_allclose(np.asarray(out), np.asarray(ref), atol=1e-4, rtol=1e-4)

    # args.max_seq_length = 8, args.hidden_size = 32, batch = 2  (lane-folded path, H < 128)
    run_case(B=2, S=8, H=32)
    # H % 128 == 0 exercises the native-layout path (no wrapper HBM transposes)
    run_case(B=2, S=8, H=128)

    print("KERNEL_OK")
</pallas_src>

<mosaic_0001>
module attributes {stable_mosaic.version = 11 : i64} {
  func.func @_filter_layer_lanes_kernel(%arg0: i32, %arg1: memref<8x64xf32, #tpu.memory_space<vmem>>, %arg2: memref<16x8xf32, #tpu.memory_space<vmem>>, %arg3: memref<8x8xf32, #tpu.memory_space<vmem>>, %arg4: memref<8x8xf32, #tpu.memory_space<vmem>>, %arg5: memref<8x64xf32, #tpu.memory_space<vmem>>, %arg6: memref<8x64xf32, #tpu.memory_space<vmem>>, %arg7: memref<64x2xf32, #tpu.memory_space<vmem>>, %arg8: memref<2x64xf32, #tpu.memory_space<vmem>>, %arg9: memref<1x64xf32, #tpu.memory_space<vmem>>, %arg10: memref<1x64xf32, #tpu.memory_space<vmem>>, %arg11: memref<8x64xf32, #tpu.memory_space<vmem>>) attributes {dimension_semantics = [#tpu.dimension_semantics<parallel>], iteration_bounds = array<i64: 1>, scalar_prefetch = 0 : i64, scratch_operands = 0 : i64, tpu.core_type = #tpu.core_type<tc>, window_params = [{transform_indices = @transform_0, window_bounds = array<i64: 8, 64>}, {pipeline_mode = #tpu.pipeline_mode<synchronous>, transform_indices = @transform_1, window_bounds = array<i64: 16, 8>}, {pipeline_mode = #tpu.pipeline_mode<synchronous>, transform_indices = @transform_2, window_bounds = array<i64: 8, 8>}, {pipeline_mode = #tpu.pipeline_mode<synchronous>, transform_indices = @transform_3, window_bounds = array<i64: 8, 8>}, {pipeline_mode = #tpu.pipeline_mode<synchronous>, transform_indices = @transform_4, window_bounds = array<i64: 8, 64>}, {pipeline_mode = #tpu.pipeline_mode<synchronous>, transform_indices = @transform_5, window_bounds = array<i64: 8, 64>}, {pipeline_mode = #tpu.pipeline_mode<synchronous>, transform_indices = @transform_6, window_bounds = array<i64: 64, 2>}, {pipeline_mode = #tpu.pipeline_mode<synchronous>, transform_indices = @transform_7, window_bounds = array<i64: 2, 64>}, {pipeline_mode = #tpu.pipeline_mode<synchronous>, transform_indices = @transform_8, window_bounds = array<i64: 1, 64>}, {pipeline_mode = #tpu.pipeline_mode<synchronous>, transform_indices = @transform_9, window_bounds = array<i64: 1, 64>}, {transform_indices = @transform_10, window_bounds = array<i64: 8, 64>}]} {
    %c0 = arith.constant 0 : index
    %c0_0 = arith.constant 0 : index
    %0 = vector.load %arg1[%c0, %c0_0] : memref<8x64xf32, #tpu.memory_space<vmem>>, vector<8x64xf32>
    %c0_1 = arith.constant 0 : index
    %c0_2 = arith.constant 0 : index
    %1 = vector.load %arg2[%c0_1, %c0_2] : memref<16x8xf32, #tpu.memory_space<vmem>>, vector<16x8xf32>
    %cst = arith.constant dense<0.000000e+00> : vector<16x64xf32>
    %2 = tpu.matmul %1, %0, %cst {dimension_numbers = #tpu.dot_dimension_numbers<[1], [0], [0], [1], [0, 0, 1, 1], [], []>} : vector<16x8xf32>, vector<8x64xf32>, vector<16x64xf32> -> vector<16x64xf32>
    %3 = vector.extract_strided_slice %2 {offsets = [0, 0], sizes = [8, 64], strides = [1, 1]} : vector<16x64xf32> to vector<8x64xf32>
    %4 = vector.extract_strided_slice %2 {offsets = [8, 0], sizes = [8, 64], strides = [1, 1]} : vector<16x64xf32> to vector<8x64xf32>
    %c0_3 = arith.constant 0 : index
    %c0_4 = arith.constant 0 : index
    %5 = vector.load %arg5[%c0_3, %c0_4] : memref<8x64xf32, #tpu.memory_space<vmem>>, vector<8x64xf32>
    %c0_5 = arith.constant 0 : index
    %c0_6 = arith.constant 0 : index
    %6 = vector.load %arg6[%c0_5, %c0_6] : memref<8x64xf32, #tpu.memory_space<vmem>>, vector<8x64xf32>
    %7 = arith.mulf %3, %5 : vector<8x64xf32>
    %8 = arith.mulf %4, %6 : vector<8x64xf32>
    %9 = arith.subf %7, %8 : vector<8x64xf32>
    %10 = arith.mulf %3, %6 : vector<8x64xf32>
    %11 = arith.mulf %4, %5 : vector<8x64xf32>
    %12 = arith.addf %10, %11 : vector<8x64xf32>
    %c0_7 = arith.constant 0 : index
    %c0_8 = arith.constant 0 : index
    %13 = vector.load %arg3[%c0_7, %c0_8] : memref<8x8xf32, #tpu.memory_space<vmem>>, vector<8x8xf32>
    %cst_9 = arith.constant dense<0.000000e+00> : vector<8x64xf32>
    %14 = tpu.matmul %13, %9, %cst_9 {dimension_numbers = #tpu.dot_dimension_numbers<[1], [0], [0], [1], [0, 0, 1, 1], [], []>} : vector<8x8xf32>, vector<8x64xf32>, vector<8x64xf32> -> vector<8x64xf32>
    %c0_10 = arith.constant 0 : index
    %c0_11 = arith.constant 0 : index
    %15 = vector.load %arg4[%c0_10, %c0_11] : memref<8x8xf32, #tpu.memory_space<vmem>>, vector<8x8xf32>
    %cst_12 = arith.constant dense<0.000000e+00> : vector<8x64xf32>
    %16 = tpu.matmul %15, %12, %cst_12 {dimension_numbers = #tpu.dot_dimension_numbers<[1], [0], [0], [1], [0, 0, 1, 1], [], []>} : vector<8x8xf32>, vector<8x64xf32>, vector<8x64xf32> -> vector<8x64xf32>
    %17 = arith.addf %14, %16 : vector<8x64xf32>
    %18 = arith.addf %17, %0 : vector<8x64xf32>
    %c0_13 = arith.constant 0 : index
    %c0_14 = arith.constant 0 : index
    %19 = vector.load %arg7[%c0_13, %c0_14] : memref<64x2xf32, #tpu.memory_space<vmem>>, vector<64x2xf32>
    %c0_15 = arith.constant 0 : index
    %c0_16 = arith.constant 0 : index
    %20 = vector.load %arg8[%c0_15, %c0_16] : memref<2x64xf32, #tpu.memory_space<vmem>>, vector<2x64xf32>
    %cst_17 = arith.constant dense<0.000000e+00> : vector<8x2xf32>
    %21 = tpu.matmul %18, %19, %cst_17 {dimension_numbers = #tpu.dot_dimension_numbers<[1], [0], [0], [1], [0, 0, 1, 1], [], []>} : vector<8x64xf32>, vector<64x2xf32>, vector<8x2xf32> -> vector<8x2xf32>
    %cst_18 = arith.constant dense<0.000000e+00> : vector<8x64xf32>
    %22 = tpu.matmul %21, %20, %cst_18 {dimension_numbers = #tpu.dot_dimension_numbers<[1], [0], [0], [1], [0, 0, 1, 1], [], []>} : vector<8x2xf32>, vector<2x64xf32>, vector<8x64xf32> -> vector<8x64xf32>
    %23 = arith.subf %18, %22 : vector<8x64xf32>
    %24 = arith.mulf %23, %23 : vector<8x64xf32>
    %cst_19 = arith.constant dense<0.000000e+00> : vector<8x2xf32>
    %25 = tpu.matmul %24, %19, %cst_19 {dimension_numbers = #tpu.dot_dimension_numbers<[1], [0], [0], [1], [0, 0, 1, 1], [], []>} : vector<8x64xf32>, vector<64x2xf32>, vector<8x2xf32> -> vector<8x2xf32>
    %cst_20 = arith.constant dense<0.000000e+00> : vector<8x64xf32>
    %26 = tpu.matmul %25, %20, %cst_20 {dimension_numbers = #tpu.dot_dimension_numbers<[1], [0], [0], [1], [0, 0, 1, 1], [], []>} : vector<8x2xf32>, vector<2x64xf32>, vector<8x64xf32> -> vector<8x64xf32>
    %c0_21 = arith.constant 0 : index
    %c0_22 = arith.constant 0 : index
    %27 = vector.load %arg9[%c0_21, %c0_22] : memref<1x64xf32, #tpu.memory_space<vmem>>, vector<1x64xf32>
    %cst_23 = arith.constant 9.99999996E-13 : f32
    %28 = vector.broadcast %cst_23 : f32 to vector<8x64xf32>
    %29 = arith.addf %26, %28 : vector<8x64xf32>
    %30 = math.rsqrt %29 : vector<8x64xf32>
    %31 = arith.mulf %23, %30 : vector<8x64xf32>
    %32 = vector.broadcast %27 : vector<1x64xf32> to vector<8x64xf32>
    %33 = arith.mulf %32, %31 : vector<8x64xf32>
    %c0_24 = arith.constant 0 : index
    %c0_25 = arith.constant 0 : index
    %34 = vector.load %arg10[%c0_24, %c0_25] : memref<1x64xf32, #tpu.memory_space<vmem>>, vector<1x64xf32>
    %35 = vector.broadcast %34 : vector<1x64xf32> to vector<8x64xf32>
    %36 = arith.addf %33, %35 : vector<8x64xf32>
    %c0_26 = arith.constant 0 : index
    %c0_27 = arith.constant 0 : index
    %37 = vector.load %arg11[%c0_26, %c0_27] : memref<8x64xf32, #tpu.memory_space<vmem>>, vector<8x64xf32>
    tpu.vector_store %arg11[%c0_26, %c0_27], %36 {strides = array<i32>} : memref<8x64xf32, #tpu.memory_space<vmem>>, vector<8x64xf32>,
    return
  }
  func.func @transform_0(%arg0: i32) -> (i32, i32) {
    %c0_i32 = arith.constant 0 : i32
    %c0_i32_0 = arith.constant 0 : i32
    return %c0_i32, %arg0 : i32, i32
  }
  func.func @transform_1(%arg0: i32) -> (i32, i32) {
    %c0_i32 = arith.constant 0 : i32
    %c0_i32_0 = arith.constant 0 : i32
    %c0_i32_1 = arith.constant 0 : i32
    return %c0_i32, %c0_i32_0 : i32, i32
  }
  func.func @transform_2(%arg0: i32) -> (i32, i32) {
    %c0_i32 = arith.constant 0 : i32
    %c0_i32_0 = arith.constant 0 : i32
    %c0_i32_1 = arith.constant 0 : i32
    return %c0_i32, %c0_i32_0 : i32, i32
  }
  func.func @transform_3(%arg0: i32) -> (i32, i32) {
    %c0_i32 = arith.constant 0 : i32
    %c0_i32_0 = arith.constant 0 : i32
    %c0_i32_1 = arith.constant 0 : i32
    return %c0_i32, %c0_i32_0 : i32, i32
  }
  func.func @transform_4(%arg0: i32) -> (i32, i32) {
    %c0_i32 = arith.constant 0 : i32
    %c0_i32_0 = arith.constant 0 : i32
    %c0_i32_1 = arith.constant 0 : i32
    return %c0_i32, %c0_i32_0 : i32, i32
  }
  func.func @transform_5(%arg0: i32) -> (i32, i32) {
    %c0_i32 = arith.constant 0 : i32
    %c0_i32_0 = arith.constant 0 : i32
    %c0_i32_1 = arith.constant 0 : i32
    return %c0_i32, %c0_i32_0 : i32, i32
  }
  func.func @transform_6(%arg0: i32) -> (i32, i32) {
    %c0_i32 = arith.constant 0 : i32
    %c0_i32_0 = arith.constant 0 : i32
    %c0_i32_1 = arith.constant 0 : i32
    return %c0_i32, %c0_i32_0 : i32, i32
  }
  func.func @transform_7(%arg0: i32) -> (i32, i32) {
    %c0_i32 = arith.constant 0 : i32
    %c0_i32_0 = arith.constant 0 : i32
    %c0_i32_1 = arith.constant 0 : i32
    return %c0_i32, %c0_i32_0 : i32, i32
  }
  func.func @transform_8(%arg0: i32) -> (i32, i32) {
    %c0_i32 = arith.constant 0 : i32
    %c0_i32_0 = arith.constant 0 : i32
    %c0_i32_1 = arith.constant 0 : i32
    return %c0_i32, %c0_i32_0 : i32, i32
  }
  func.func @transform_9(%arg0: i32) -> (i32, i32) {
    %c0_i32 = arith.constant 0 : i32
    %c0_i32_0 = arith.constant 0 : i32
    %c0_i32_1 = arith.constant 0 : i32
    return %c0_i32, %c0_i32_0 : i32, i32
  }
  func.func @transform_10(%arg0: i32) -> (i32, i32) {
    %c0_i32 = arith.constant 0 : i32
    %c0_i32_0 = arith.constant 0 : i32
    return %c0_i32, %arg0 : i32, i32
  }
}

module attributes {stable_mosaic.version = 11 : i64} {
  func.func @_filter_layer_lanes_kernel(%arg0: i32, %arg1: memref<8x64xf32, #tpu.memory_space<vmem>>, %arg2: memref<16x8xf32, #tpu.memory_space<vmem>>, %arg3: memref<8x8xf32, #tpu.memory_space<vmem>>, %arg4: memref<8x8xf32, #tpu.memory_space<vmem>>, %arg5: memref<8x64xf32, #tpu.memory_space<vmem>>, %arg6: memref<8x64xf32, #tpu.memory_space<vmem>>, %arg7: memref<64x2xf32, #tpu.memory_space<vmem>>, %arg8: memref<2x64xf32, #tpu.memory_space<vmem>>, %arg9: memref<1x64xf32, #tpu.memory_space<vmem>>, %arg10: memref<1x64xf32, #tpu.memory_space<vmem>>, %arg11: memref<8x64xf32, #tpu.memory_space<vmem>>) attributes {dimension_semantics = [#tpu.dimension_semantics<parallel>], iteration_bounds = array<i64: 1>, scalar_prefetch = 0 : i64, scratch_operands = 0 : i64, tpu.core_type = #tpu.core_type<tc>, window_params = [{transform_indices = @transform_0, window_bounds = array<i64: 8, 64>}, {pipeline_mode = #tpu.pipeline_mode<synchronous>, transform_indices = @transform_1, window_bounds = array<i64: 16, 8>}, {pipeline_mode = #tpu.pipeline_mode<synchronous>, transform_indices = @transform_2, window_bounds = array<i64: 8, 8>}, {pipeline_mode = #tpu.pipeline_mode<synchronous>, transform_indices = @transform_3, window_bounds = array<i64: 8, 8>}, {pipeline_mode = #tpu.pipeline_mode<synchronous>, transform_indices = @transform_4, window_bounds = array<i64: 8, 64>}, {pipeline_mode = #tpu.pipeline_mode<synchronous>, transform_indices = @transform_5, window_bounds = array<i64: 8, 64>}, {pipeline_mode = #tpu.pipeline_mode<synchronous>, transform_indices = @transform_6, window_bounds = array<i64: 64, 2>}, {pipeline_mode = #tpu.pipeline_mode<synchronous>, transform_indices = @transform_7, window_bounds = array<i64: 2, 64>}, {pipeline_mode = #tpu.pipeline_mode<synchronous>, transform_indices = @transform_8, window_bounds = array<i64: 1, 64>}, {pipeline_mode = #tpu.pipeline_mode<synchronous>, transform_indices = @transform_9, window_bounds = array<i64: 1, 64>}, {transform_indices = @transform_10, window_bounds = array<i64: 8, 64>}]} {
    %c0 = arith.constant 0 : index
    %c0_0 = arith.constant 0 : index
    %0 = vector.load %arg1[%c0, %c0_0] : memref<8x64xf32, #tpu.memory_space<vmem>>, vector<8x64xf32>
    %c0_1 = arith.constant 0 : index
    %c0_2 = arith.constant 0 : index
    %1 = vector.load %arg2[%c0_1, %c0_2] : memref<16x8xf32, #tpu.memory_space<vmem>>, vector<16x8xf32>
    %cst = arith.constant dense<0.000000e+00> : vector<16x64xf32>
    %2 = tpu.matmul %1, %0, %cst {dimension_numbers = #tpu.dot_dimension_numbers<[1], [0], [0], [1], [0, 0, 1, 1], [], []>} : vector<16x8xf32>, vector<8x64xf32>, vector<16x64xf32> -> vector<16x64xf32>
    %3 = vector.extract_strided_slice %2 {offsets = [0, 0], sizes = [8, 64], strides = [1, 1]} : vector<16x64xf32> to vector<8x64xf32>
    %4 = vector.extract_strided_slice %2 {offsets = [8, 0], sizes = [8, 64], strides = [1, 1]} : vector<16x64xf32> to vector<8x64xf32>
    %c0_3 = arith.constant 0 : index
    %c0_4 = arith.constant 0 : index
    %5 = vector.load %arg5[%c0_3, %c0_4] : memref<8x64xf32, #tpu.memory_space<vmem>>, vector<8x64xf32>
    %c0_5 = arith.constant 0 : index
    %c0_6 = arith.constant 0 : index
    %6 = vector.load %arg6[%c0_5, %c0_6] : memref<8x64xf32, #tpu.memory_space<vmem>>, vector<8x64xf32>
    %7 = arith.mulf %3, %5 : vector<8x64xf32>
    %8 = arith.mulf %4, %6 : vector<8x64xf32>
    %9 = arith.subf %7, %8 : vector<8x64xf32>
    %10 = arith.mulf %3, %6 : vector<8x64xf32>
    %11 = arith.mulf %4, %5 : vector<8x64xf32>
    %12 = arith.addf %10, %11 : vector<8x64xf32>
    %c0_7 = arith.constant 0 : index
    %c0_8 = arith.constant 0 : index
    %13 = vector.load %arg3[%c0_7, %c0_8] : memref<8x8xf32, #tpu.memory_space<vmem>>, vector<8x8xf32>
    %cst_9 = arith.constant dense<0.000000e+00> : vector<8x64xf32>
    %14 = tpu.matmul %13, %9, %cst_9 {dimension_numbers = #tpu.dot_dimension_numbers<[1], [0], [0], [1], [0, 0, 1, 1], [], []>} : vector<8x8xf32>, vector<8x64xf32>, vector<8x64xf32> -> vector<8x64xf32>
    %c0_10 = arith.constant 0 : index
    %c0_11 = arith.constant 0 : index
    %15 = vector.load %arg4[%c0_10, %c0_11] : memref<8x8xf32, #tpu.memory_space<vmem>>, vector<8x8xf32>
    %cst_12 = arith.constant dense<0.000000e+00> : vector<8x64xf32>
    %16 = tpu.matmul %15, %12, %cst_12 {dimension_numbers = #tpu.dot_dimension_numbers<[1], [0], [0], [1], [0, 0, 1, 1], [], []>} : vector<8x8xf32>, vector<8x64xf32>, vector<8x64xf32> -> vector<8x64xf32>
    %17 = arith.addf %14, %16 : vector<8x64xf32>
    %18 = arith.addf %17, %0 : vector<8x64xf32>
    %c0_13 = arith.constant 0 : index
    %c0_14 = arith.constant 0 : index
    %19 = vector.load %arg7[%c0_13, %c0_14] : memref<64x2xf32, #tpu.memory_space<vmem>>, vector<64x2xf32>
    %c0_15 = arith.constant 0 : index
    %c0_16 = arith.constant 0 : index
    %20 = vector.load %arg8[%c0_15, %c0_16] : memref<2x64xf32, #tpu.memory_space<vmem>>, vector<2x64xf32>
    %cst_17 = arith.constant dense<0.000000e+00> : vector<8x2xf32>
    %21 = tpu.matmul %18, %19, %cst_17 {dimension_numbers = #tpu.dot_dimension_numbers<[1], [0], [0], [1], [0, 0, 1, 1], [], []>} : vector<8x64xf32>, vector<64x2xf32>, vector<8x2xf32> -> vector<8x2xf32>
    %cst_18 = arith.constant dense<0.000000e+00> : vector<8x64xf32>
    %22 = tpu.matmul %21, %20, %cst_18 {dimension_numbers = #tpu.dot_dimension_numbers<[1], [0], [0], [1], [0, 0, 1, 1], [], []>} : vector<8x2xf32>, vector<2x64xf32>, vector<8x64xf32> -> vector<8x64xf32>
    %23 = arith.subf %18, %22 : vector<8x64xf32>
    %24 = arith.mulf %23, %23 : vector<8x64xf32>
    %cst_19 = arith.constant dense<0.000000e+00> : vector<8x2xf32>
    %25 = tpu.matmul %24, %19, %cst_19 {dimension_numbers = #tpu.dot_dimension_numbers<[1], [0], [0], [1], [0, 0, 1, 1], [], []>} : vector<8x64xf32>, vector<64x2xf32>, vector<8x2xf32> -> vector<8x2xf32>
    %cst_20 = arith.constant dense<0.000000e+00> : vector<8x64xf32>
    %26 = tpu.matmul %25, %20, %cst_20 {dimension_numbers = #tpu.dot_dimension_numbers<[1], [0], [0], [1], [0, 0, 1, 1], [], []>} : vector<8x2xf32>, vector<2x64xf32>, vector<8x64xf32> -> vector<8x64xf32>
    %c0_21 = arith.constant 0 : index
    %c0_22 = arith.constant 0 : index
    %27 = vector.load %arg9[%c0_21, %c0_22] : memref<1x64xf32, #tpu.memory_space<vmem>>, vector<1x64xf32>
    %cst_23 = arith.constant 9.99999996E-13 : f32
    %28 = vector.broadcast %cst_23 : f32 to vector<8x64xf32>
    %29 = arith.addf %26, %28 : vector<8x64xf32>
    %30 = math.rsqrt %29 : vector<8x64xf32>
    %31 = arith.mulf %23, %30 : vector<8x64xf32>
    %32 = vector.broadcast %27 : vector<1x64xf32> to vector<8x64xf32>
    %33 = arith.mulf %32, %31 : vector<8x64xf32>
    %c0_24 = arith.constant 0 : index
    %c0_25 = arith.constant 0 : index
    %34 = vector.load %arg10[%c0_24, %c0_25] : memref<1x64xf32, #tpu.memory_space<vmem>>, vector<1x64xf32>
    %35 = vector.broadcast %34 : vector<1x64xf32> to vector<8x64xf32>
    %36 = arith.addf %33, %35 : vector<8x64xf32>
    %c0_26 = arith.constant 0 : index
    %c0_27 = arith.constant 0 : index
    %37 = vector.load %arg11[%c0_26, %c0_27] : memref<8x64xf32, #tpu.memory_space<vmem>>, vector<8x64xf32>
    tpu.vector_store %arg11[%c0_26, %c0_27], %36 {strides = array<i32>} : memref<8x64xf32, #tpu.memory_space<vmem>>, vector<8x64xf32>,
    return
  }
  func.func @transform_0(%arg0: i32) -> (i32, i32) {
    %c0_i32 = arith.constant 0 : i32
    %c0_i32_0 = arith.constant 0 : i32
    return %c0_i32, %arg0 : i32, i32
  }
  func.func @transform_1(%arg0: i32) -> (i32, i32) {
    %c0_i32 = arith.constant 0 : i32
    %c0_i32_0 = arith.constant 0 : i32
    %c0_i32_1 = arith.constant 0 : i32
    return %c0_i32, %c0_i32_0 : i32, i32
  }
  func.func @transform_2(%arg0: i32) -> (i32, i32) {
    %c0_i32 = arith.constant 0 : i32
    %c0_i32_0 = arith.constant 0 : i32
    %c0_i32_1 = arith.constant 0 : i32
    return %c0_i32, %c0_i32_0 : i32, i32
  }
  func.func @transform_3(%arg0: i32) -> (i32, i32) {
    %c0_i32 = arith.constant 0 : i32
    %c0_i32_0 = arith.constant 0 : i32
    %c0_i32_1 = arith.constant 0 : i32
    return %c0_i32, %c0_i32_0 : i32, i32
  }
  func.func @transform_4(%arg0: i32) -> (i32, i32) {
    %c0_i32 = arith.constant 0 : i32
    %c0_i32_0 = arith.constant 0 : i32
    %c0_i32_1 = arith.constant 0 : i32
    return %c0_i32, %c0_i32_0 : i32, i32
  }
  func.func @transform_5(%arg0: i32) -> (i32, i32) {
    %c0_i32 = arith.constant 0 : i32
    %c0_i32_0 = arith.constant 0 : i32
    %c0_i32_1 = arith.constant 0 : i32
    return %c0_i32, %c0_i32_0 : i32, i32
  }
  func.func @transform_6(%arg0: i32) -> (i32, i32) {
    %c0_i32 = arith.constant 0 : i32
    %c0_i32_0 = arith.constant 0 : i32
    %c0_i32_1 = arith.constant 0 : i32
    return %c0_i32, %c0_i32_0 : i32, i32
  }
  func.func @transform_7(%arg0: i32) -> (i32, i32) {
    %c0_i32 = arith.constant 0 : i32
    %c0_i32_0 = arith.constant 0 : i32
    %c0_i32_1 = arith.constant 0 : i32
    return %c0_i32, %c0_i32_0 : i32, i32
  }
  func.func @transform_8(%arg0: i32) -> (i32, i32) {
    %c0_i32 = arith.constant 0 : i32
    %c0_i32_0 = arith.constant 0 : i32
    %c0_i32_1 = arith.constant 0 : i32
    return %c0_i32, %c0_i32_0 : i32, i32
  }
  func.func @transform_9(%arg0: i32) -> (i32, i32) {
    %c0_i32 = arith.constant 0 : i32
    %c0_i32_0 = arith.constant 0 : i32
    %c0_i32_1 = arith.constant 0 : i32
    return %c0_i32, %c0_i32_0 : i32, i32
  }
  func.func @transform_10(%arg0: i32) -> (i32, i32) {
    %c0_i32 = arith.constant 0 : i32
    %c0_i32_0 = arith.constant 0 : i32
    return %c0_i32, %arg0 : i32, i32
  }
}

</mosaic_0001>

<llo_original>
// kernel: tpu_custom_call.1
$region0: #{tpu_custom_call.1}
  #allocation0 [shape = 'u32[]', space=smem, size = 0x4, offset = 0x4, fixed_abs, tag = 'smem constant byte address 0x4 - core index']
  #allocation1 [shape = 'u32[144,128]{1,0:T(1,128)}', space=vmem, size = 0x12000, scoped, tag = 'internal scratch']
  %s0 = inlined_call_operand.vmem [shape: f32[8,64], index: 0, kind: input, shape index: {}]
  %s1 = inlined_call_operand.vmem [shape: f32[16,8], index: 1, kind: input, shape index: {}]
  %s2 = inlined_call_operand.vmem [shape: f32[8,8], index: 2, kind: input, shape index: {}]
  %s3 = inlined_call_operand.vmem [shape: f32[8,8], index: 3, kind: input, shape index: {}]
  %s4 = inlined_call_operand.vmem [shape: f32[8,64], index: 4, kind: input, shape index: {}]
  %s5 = inlined_call_operand.vmem [shape: f32[8,64], index: 5, kind: input, shape index: {}]
  %s6 = inlined_call_operand.vmem [shape: f32[64,2], index: 6, kind: input, shape index: {}]
  %s7 = inlined_call_operand.vmem [shape: f32[2,64], index: 7, kind: input, shape index: {}]
  %s8 = inlined_call_operand.vmem [shape: f32[1,64], index: 8, kind: input, shape index: {}]
  %s9 = inlined_call_operand.vmem [shape: f32[1,64], index: 9, kind: input, shape index: {}]
  %s10 = inlined_call_operand.hbm [shape: f32[8,64], index: 10, kind: output, shape index: {}]
  %s11 = sld [smem:[#allocation0]]
  $region50: #{tpu_custom_call.1} parent=0
    _
  %s13 = ssub.s32 1, %s11
  %s14 = scalar_select 0, %s13, %s11
  $region1: #{tpu_custom_call.1} parent=0
    #allocation2 [shape = 'u8[4096]{0}', space=vmem, size = 0x1000, scoped, tag = 'output window, operand 0, single buffered']
    #allocation3 [shape = 's32[1]{0}', space=sflag, size = 0x4, scoped, tag = 'scoped memory for tpu_custom_call.1']
    %15 = vsyncpa [#allocation3], 0
    // Predicated region
    $region2: #{tpu_custom_call.1} parent=1 // pred_check
      _
    $region3: #{tpu_custom_call.1} parent=1 // pred_check_branch
      %17 = sbr.rel (0) target = $region5
    $region4: #{tpu_custom_call.1} parent=1 // pred_region
      _
    $region5: #{tpu_custom_call.1} parent=1 // pred_fallthru
      _
    // Predicated region
    $region6: #{tpu_custom_call.1} parent=1 // pred_check
      _
    $region7: #{tpu_custom_call.1} parent=1 // pred_check_branch
      %19 = sbr.rel (0) target = $region9
    $region8: #{tpu_custom_call.1} parent=1 // pred_region
      _
    $region9: #{tpu_custom_call.1} parent=1 // pred_fallthru
      _
    // Predicated region
    $region10: #{tpu_custom_call.1} parent=1 // pred_check
      _
    $region11: #{tpu_custom_call.1} parent=1 // pred_check_branch
      %21 = sbr.rel (0) target = $region13
    $region12: #{tpu_custom_call.1} parent=1 // pred_region
      _
    $region13: #{tpu_custom_call.1} parent=1 // pred_fallthru
      _
    // Predicated region
    $region14: #{tpu_custom_call.1} parent=1 // pred_check
      _
    $region15: #{tpu_custom_call.1} parent=1 // pred_check_branch
      %23 = sbr.rel (0) target = $region17
    $region16: #{tpu_custom_call.1} parent=1 // pred_region
      _
    $region17: #{tpu_custom_call.1} parent=1 // pred_fallthru
      _
    // Predicated region
    $region18: #{tpu_custom_call.1} parent=1 // pred_check
      _
    $region19: #{tpu_custom_call.1} parent=1 // pred_check_branch
      %25 = sbr.rel (0) target = $region21
    $region20: #{tpu_custom_call.1} parent=1 // pred_region
      _
    $region21: #{tpu_custom_call.1} parent=1 // pred_fallthru
      _
    // Predicated region
    $region22: #{tpu_custom_call.1} parent=1 // pred_check
      _
    $region23: #{tpu_custom_call.1} parent=1 // pred_check_branch
      %27 = sbr.rel (0) target = $region25
    $region24: #{tpu_custom_call.1} parent=1 // pred_region
      _
    $region25: #{tpu_custom_call.1} parent=1 // pred_fallthru
      _
    // Predicated region
    $region26: #{tpu_custom_call.1} parent=1 // pred_check
      _
    $region27: #{tpu_custom_call.1} parent=1 // pred_check_branch
      %29 = sbr.rel (0) target = $region29
    $region28: #{tpu_custom_call.1} parent=1 // pred_region
      _
    $region29: #{tpu_custom_call.1} parent=1 // pred_fallthru
      _
    // Predicated region
    $region30: #{tpu_custom_call.1} parent=1 // pred_check
      _
    $region31: #{tpu_custom_call.1} parent=1 // pred_check_branch
      %31 = sbr.rel (0) target = $region33
    $region32: #{tpu_custom_call.1} parent=1 // pred_region
      _
    $region33: #{tpu_custom_call.1} parent=1 // pred_fallthru
      _
    // Predicated region
    $region34: #{tpu_custom_call.1} parent=1 // pred_check
      _
    $region35: #{tpu_custom_call.1} parent=1 // pred_check_branch
      %33 = sbr.rel (0) target = $region37
    $region36: #{tpu_custom_call.1} parent=1 // pred_region
      _
    $region37: #{tpu_custom_call.1} parent=1 // pred_fallthru
      _
    // Predicated region
    $region38: #{tpu_custom_call.1} parent=1 // pred_check
      _
    $region39: #{tpu_custom_call.1} parent=1 // pred_check_branch
      %35 = sbr.rel (0) target = $region41
    $region40: #{tpu_custom_call.1} parent=1 // pred_region
      _
    $region41: #{tpu_custom_call.1} parent=1 // pred_fallthru
      _
    %v36 = vld [vmem:[%s0] sm:$0xff]
    %v37 = vld [vmem:[%s1] sm:$0xff]
    %v38 = vld [vmem:[%s1 + $0x8] sm:$0xff]
    %vm39 = vcmask 64512
    %v41 = vsel %vm39, %v37, 0
    %v44 = vsel %vm39, %v38, 0
    %46 = vmatprep.subr.mxu0 0.0
    %47 = vmatpush1.msra.mxu0 %v36
    %48 = vmatprep.subr.mxu0 0.0
    %49 = vmatpush1.msra.mxu0 0.0
    %50 = vmatprep.subr.mxu0 0.0
    %51 = vmatpush1.msra.mxu0 0.0
    %52 = vmatprep.subr.mxu0 0.0
    %53 = vmatpush1.msra.mxu0 0.0
    %54 = vmatprep.subr.mxu0 0.0
    %55 = vmatpush1.msra.mxu0 0.0
    %56 = vmatprep.subr.mxu0 0.0
    %57 = vmatpush1.msra.mxu0 0.0
    %58 = vmatprep.subr.mxu0 0.0
    %59 = vmatpush1.msra.mxu0 0.0
    %60 = vmatprep.subr.mxu0 0.0
    %61 = vmatpush1.msra.mxu0 0.0
    %62 = vmatprep.subr.mxu0 0.0
    %63 = vmatpush1.msra.mxu0 0.0
    %64 = vmatprep.subr.mxu0 0.0
    %65 = vmatpush1.msra.mxu0 0.0
    %66 = vmatprep.subr.mxu0 0.0
    %67 = vmatpush1.msra.mxu0 0.0
    %68 = vmatprep.subr.mxu0 0.0
    %69 = vmatpush1.msra.mxu0 0.0
    %70 = vmatprep.subr.mxu0 0.0
    %71 = vmatpush1.msra.mxu0 0.0
    %72 = vmatprep.subr.mxu0 0.0
    %73 = vmatpush1.msra.mxu0 0.0
    %74 = vmatprep.subr.mxu0 0.0
    %75 = vmatpush1.msra.mxu0 0.0
    %76 = vmatprep.subr.mxu0 0.0
    %77 = vmatpush1.msra.mxu0 0.0
    %78 = vmatprep.subr.mxu0 0.0
    %79 = vmatpush1.msra.mxu0 0.0
    %80 = vmatprep.subr.mxu0 0.0
    %81 = vmatpush1.msra.mxu0 0.0
    %82 = vmatprep.subr.mxu0 0.0
    %83 = vmatpush1.msra.mxu0 0.0
    %84 = vmatprep.subr.mxu0 0.0
    %85 = vmatpush1.msra.mxu0 0.0
    %86 = vmatprep.subr.mxu0 0.0
    %87 = vmatpush1.msra.mxu0 0.0
    %88 = vmatprep.subr.mxu0 0.0
    %89 = vmatpush1.msra.mxu0 0.0
    %90 = vmatprep.subr.mxu0 0.0
    %91 = vmatpush1.msra.mxu0 0.0
    %92 = vmatprep.subr.mxu0 0.0
    %93 = vmatpush1.msra.mxu0 0.0
    %94 = vmatprep.subr.mxu0 0.0
    %95 = vmatpush1.msra.mxu0 0.0
    %96 = vmatprep.subr.mxu0 0.0
    %97 = vmatpush1.msra.mxu0 0.0
    %98 = vmatprep.subr.mxu0 0.0
    %99 = vmatpush1.msra.mxu0 0.0
    %100 = vmatprep.subr.mxu0 0.0
    %101 = vmatpush1.msra.mxu0 0.0
    %102 = vmatprep.subr.mxu0 0.0
    %103 = vmatpush1.msra.mxu0 0.0
    %104 = vmatprep.subr.mxu0 0.0
    %105 = vmatpush1.msra.mxu0 0.0
    %106 = vmatprep.subr.mxu0 0.0
    %107 = vmatpush1.msra.mxu0 0.0
    %108 = vmatprep.subr.mxu0 0.0
    %109 = vmatpush1.msra.mxu0 0.0
    %110 = vmatprep.mubr.f32.mxu0 0.0
    %111 = vmatmul.mubr.f32.gmra.mrb[0].mxu0 %v41
    %v112 = vpop.f32.mrb[0].mxu0
    %v113 = vadd.f32 0.0, %v112
    %v114 = vpop.f32.mrb[0].mxu0
    %115 = vmatprep.mubr.f32.mxu0 0.0
    %116 = vmatmul.mubr.f32.gmra.mrb[0].mxu0 %v44
    %v117 = vpop.f32.mrb[0].mxu0
    %v118 = vadd.f32 0.0, %v117
    %v119 = vpop.f32.mrb[0].mxu0
    %120 = vdwg.mxu0
    %v121 = vld [vmem:[%s4] sm:$0xff]
    %v122 = vld [vmem:[%s5] sm:$0xff]
    %v123 = vmul.f32 %v113, %v121
    %v124 = vmul.f32 %v118, %v122
    %v125 = vsub.f32 %v123, %v124
    %v126 = vmul.f32 %v113, %v122
    %v127 = vmul.f32 %v118, %v121
    %v128 = vadd.f32 %v126, %v127
    %v129 = vld [vmem:[%s2] sm:$0xff]
    %v130 = vld [vmem:[%s3] sm:$0xff]
    %v132 = vsel %vm39, %v130, 0
    %134 = vmatprep.subr.mxu0 0.0
    %135 = vmatpush1.msra.mxu0 %v128
    %136 = vmatprep.subr.mxu0 0.0
    %137 = vmatpush1.msra.mxu0 0.0
    %138 = vmatprep.subr.mxu0 0.0
    %139 = vmatpush1.msra.mxu0 0.0
    %140 = vmatprep.subr.mxu0 0.0
    %141 = vmatpush1.msra.mxu0 0.0
    %142 = vmatprep.subr.mxu0 0.0
    %143 = vmatpush1.msra.mxu0 0.0
    %144 = vmatprep.subr.mxu0 0.0
    %145 = vmatpush1.msra.mxu0 0.0
    %146 = vmatprep.subr.mxu0 0.0
    %147 = vmatpush1.msra.mxu0 0.0
    %148 = vmatprep.subr.mxu0 0.0
    %149 = vmatpush1.msra.mxu0 0.0
    %150 = vmatprep.subr.mxu0 0.0
    %151 = vmatpush1.msra.mxu0 0.0
    %152 = vmatprep.subr.mxu0 0.0
    %153 = vmatpush1.msra.mxu0 0.0
    %154 = vmatprep.subr.mxu0 0.0
    %155 = vmatpush1.msra.mxu0 0.0
    %156 = vmatprep.subr.mxu0 0.0
    %157 = vmatpush1.msra.mxu0 0.0
    %158 = vmatprep.subr.mxu0 0.0
    %159 = vmatpush1.msra.mxu0 0.0
    %160 = vmatprep.subr.mxu0 0.0
    %161 = vmatpush1.msra.mxu0 0.0
    %162 = vmatprep.subr.mxu0 0.0
    %163 = vmatpush1.msra.mxu0 0.0
    %164 = vmatprep.subr.mxu0 0.0
    %165 = vmatpush1.msra.mxu0 0.0
    %166 = vmatprep.subr.mxu0 0.0
    %167 = vmatpush1.msra.mxu0 0.0
    %168 = vmatprep.subr.mxu0 0.0
    %169 = vmatpush1.msra.mxu0 0.0
    %170 = vmatprep.subr.mxu0 0.0
    %171 = vmatpush1.msra.mxu0 0.0
    %172 = vmatprep.subr.mxu0 0.0
    %173 = vmatpush1.msra.mxu0 0.0
    %174 = vmatprep.subr.mxu0 0.0
    %175 = vmatpush1.msra.mxu0 0.0
    %176 = vmatprep.subr.mxu0 0.0
    %177 = vmatpush1.msra.mxu0 0.0
    %178 = vmatprep.subr.mxu0 0.0
    %179 = vmatpush1.msra.mxu0 0.0
    %180 = vmatprep.subr.mxu0 0.0
    %181 = vmatpush1.msra.mxu0 0.0
    %182 = vmatprep.subr.mxu0 0.0
    %183 = vmatpush1.msra.mxu0 0.0
    %184 = vmatprep.subr.mxu0 0.0
    %185 = vmatpush1.msra.mxu0 0.0
    %186 = vmatprep.subr.mxu0 0.0
    %187 = vmatpush1.msra.mxu0 0.0
    %188 = vmatprep.subr.mxu0 0.0
    %189 = vmatpush1.msra.mxu0 0.0
    %190 = vmatprep.subr.mxu0 0.0
    %191 = vmatpush1.msra.mxu0 0.0
    %192 = vmatprep.subr.mxu0 0.0
    %193 = vmatpush1.msra.mxu0 0.0
    %194 = vmatprep.subr.mxu0 0.0
    %195 = vmatpush1.msra.mxu0 0.0
    %196 = vmatprep.subr.mxu0 0.0
    %197 = vmatpush1.msra.mxu0 0.0
    %198 = vmatprep.mubr.f32.mxu0 0.0
    %199 = vmatmul.mubr.f32.gmra.mrb[0].mxu0 %v132
    %v200 = vpop.f32.mrb[0].mxu0
    %v201 = vadd.f32 0.0, %v200
    %v202 = vpop.f32.mrb[0].mxu0
    %203 = vdwg.mxu0
    %v205 = vsel %vm39, %v129, 0
    %207 = vmatprep.subr.mxu0 0.0
    %208 = vmatpush1.msra.mxu0 %v125
    %209 = vmatprep.subr.mxu0 0.0
    %210 = vmatpush1.msra.mxu0 0.0
    %211 = vmatprep.subr.mxu0 0.0
    %212 = vmatpush1.msra.mxu0 0.0
    %213 = vmatprep.subr.mxu0 0.0
    %214 = vmatpush1.msra.mxu0 0.0
    %215 = vmatprep.subr.mxu0 0.0
    %216 = vmatpush1.msra.mxu0 0.0
    %217 = vmatprep.subr.mxu0 0.0
    %218 = vmatpush1.msra.mxu0 0.0
    %219 = vmatprep.subr.mxu0 0.0
    %220 = vmatpush1.msra.mxu0 0.0
    %221 = vmatprep.subr.mxu0 0.0
    %222 = vmatpush1.msra.mxu0 0.0
    %223 = vmatprep.subr.mxu0 0.0
    %224 = vmatpush1.msra.mxu0 0.0
    %225 = vmatprep.subr.mxu0 0.0
    %226 = vmatpush1.msra.mxu0 0.0
    %227 = vmatprep.subr.mxu0 0.0
    %228 = vmatpush1.msra.mxu0 0.0
    %229 = vmatprep.subr.mxu0 0.0
    %230 = vmatpush1.msra.mxu0 0.0
    %231 = vmatprep.subr.mxu0 0.0
    %232 = vmatpush1.msra.mxu0 0.0
    %233 = vmatprep.subr.mxu0 0.0
    %234 = vmatpush1.msra.mxu0 0.0
    %235 = vmatprep.subr.mxu0 0.0
    %236 = vmatpush1.msra.mxu0 0.0
    %237 = vmatprep.subr.mxu0 0.0
    %238 = vmatpush1.msra.mxu0 0.0
    %239 = vmatprep.subr.mxu0 0.0
    %240 = vmatpush1.msra.mxu0 0.0
    %241 = vmatprep.subr.mxu0 0.0
    %242 = vmatpush1.msra.mxu0 0.0
    %243 = vmatprep.subr.mxu0 0.0
    %244 = vmatpush1.msra.mxu0 0.0
    %245 = vmatprep.subr.mxu0 0.0
    %246 = vmatpush1.msra.mxu0 0.0
    %247 = vmatprep.subr.mxu0 0.0
    %248 = vmatpush1.msra.mxu0 0.0
    %249 = vmatprep.subr.mxu0 0.0
    %250 = vmatpush1.msra.mxu0 0.0
    %251 = vmatprep.subr.mxu0 0.0
    %252 = vmatpush1.msra.mxu0 0.0
    %253 = vmatprep.subr.mxu0 0.0
    %254 = vmatpush1.msra.mxu0 0.0
    %255 = vmatprep.subr.mxu0 0.0
    %256 = vmatpush1.msra.mxu0 0.0
    %257 = vmatprep.subr.mxu0 0.0
    %258 = vmatpush1.msra.mxu0 0.0
    %259 = vmatprep.subr.mxu0 0.0
    %260 = vmatpush1.msra.mxu0 0.0
    %261 = vmatprep.subr.mxu0 0.0
    %262 = vmatpush1.msra.mxu0 0.0
    %263 = vmatprep.subr.mxu0 0.0
    %264 = vmatpush1.msra.mxu0 0.0
    %265 = vmatprep.subr.mxu0 0.0
    %266 = vmatpush1.msra.mxu0 0.0
    %267 = vmatprep.subr.mxu0 0.0
    %268 = vmatpush1.msra.mxu0 0.0
    %269 = vmatprep.subr.mxu0 0.0
    %270 = vmatpush1.msra.mxu0 0.0
    %271 = vmatprep.mubr.f32.mxu0 0.0
    %272 = vmatmul.mubr.f32.gmra.mrb[0].mxu0 %v205
    %v273 = vpop.f32.mrb[0].mxu0
    %v274 = vadd.f32 %v201, %v273
    %v275 = vpop.f32.mrb[0].mxu0
    %276 = vdwg.mxu0
    %v277 = vadd.f32 %v274, %v36
    %v278 = vld [vmem:[%s6] sm:$0xff]
    %v279 = vld [vmem:[%s6 + $0x8] sm:$0xff]
    %v280 = vld [vmem:[%s6 + $0x10] sm:$0xff]
    %v281 = vld [vmem:[%s6 + $0x18] sm:$0xff]
    %v282 = vld [vmem:[%s6 + $0x20] sm:$0xff]
    %v283 = vld [vmem:[%s6 + $0x28] sm:$0xff]
    %v284 = vld [vmem:[%s6 + $0x30] sm:$0xff]
    %v285 = vld [vmem:[%s6 + $0x38] sm:$0xff]
    %v286 = vld [vmem:[%s7] sm:$0x3]
    %vm287 = vcmask 523264
    %v289 = vsel %vm287, %v277, 0
    %291 = vmatprep.subr.mxu0 0.0
    %292 = vmatpush1.msra.mxu0 %v278
    %293 = vmatprep.subr.mxu0 0.0
    %294 = vmatpush1.msra.mxu0 %v279
    %295 = vmatprep.subr.mxu0 0.0
    %296 = vmatpush1.msra.mxu0 %v280
    %297 = vmatprep.subr.mxu0 0.0
    %298 = vmatpush1.msra.mxu0 %v281
    %299 = vmatprep.subr.mxu0 0.0
    %300 = vmatpush1.msra.mxu0 %v282
    %301 = vmatprep.subr.mxu0 0.0
    %302 = vmatpush1.msra.mxu0 %v283
    %303 = vmatprep.subr.mxu0 0.0
    %304 = vmatpush1.msra.mxu0 %v284
    %305 = vmatprep.subr.mxu0 0.0
    %306 = vmatpush1.msra.mxu0 %v285
    %307 = vmatprep.subr.mxu0 0.0
    %308 = vmatpush1.msra.mxu0 0.0
    %309 = vmatprep.subr.mxu0 0.0
    %310 = vmatpush1.msra.mxu0 0.0
    %311 = vmatprep.subr.mxu0 0.0
    %312 = vmatpush1.msra.mxu0 0.0
    %313 = vmatprep.subr.mxu0 0.0
    %314 = vmatpush1.msra.mxu0 0.0
    %315 = vmatprep.subr.mxu0 0.0
    %316 = vmatpush1.msra.mxu0 0.0
    %317 = vmatprep.subr.mxu0 0.0
    %318 = vmatpush1.msra.mxu0 0.0
    %319 = vmatprep.subr.mxu0 0.0
    %320 = vmatpush1.msra.mxu0 0.0
    %321 = vmatprep.subr.mxu0 0.0
    %322 = vmatpush1.msra.mxu0 0.0
    %323 = vmatprep.subr.mxu0 0.0
    %324 = vmatpush1.msra.mxu0 0.0
    %325 = vmatprep.subr.mxu0 0.0
    %326 = vmatpush1.msra.mxu0 0.0
    %327 = vmatprep.subr.mxu0 0.0
    %328 = vmatpush1.msra.mxu0 0.0
    %329 = vmatprep.subr.mxu0 0.0
    %330 = vmatpush1.msra.mxu0 0.0
    %331 = vmatprep.subr.mxu0 0.0
    %332 = vmatpush1.msra.mxu0 0.0
    %333 = vmatprep.subr.mxu0 0.0
    %334 = vmatpush1.msra.mxu0 0.0
    %335 = vmatprep.subr.mxu0 0.0
    %336 = vmatpush1.msra.mxu0 0.0
    %337 = vmatprep.subr.mxu0 0.0
    %338 = vmatpush1.msra.mxu0 0.0
    %339 = vmatprep.subr.mxu0 0.0
    %340 = vmatpush1.msra.mxu0 0.0
    %341 = vmatprep.subr.mxu0 0.0
    %342 = vmatpush1.msra.mxu0 0.0
    %343 = vmatprep.subr.mxu0 0.0
    %344 = vmatpush1.msra.mxu0 0.0
    %345 = vmatprep.subr.mxu0 0.0
    %346 = vmatpush1.msra.mxu0 0.0
    %347 = vmatprep.subr.mxu0 0.0
    %348 = vmatpush1.msra.mxu0 0.0
    %349 = vmatprep.subr.mxu0 0.0
    %350 = vmatpush1.msra.mxu0 0.0
    %351 = vmatprep.subr.mxu0 0.0
    %352 = vmatpush1.msra.mxu0 0.0
    %353 = vmatprep.subr.mxu0 0.0
    %354 = vmatpush1.msra.mxu0 0.0
    %355 = vmatprep.mubr.f32.mxu0 0.0
    %356 = vmatmul.mubr.f32.gmra.mrb[0].mxu0 %v289
    %v357 = vpop.f32.mrb[0].mxu0
    %v358 = vadd.f32 0.0, %v357
    %v359 = vpop.f32.mrb[0].mxu0
    %360 = vdwg.mxu0
    %vm361 = vcmask 15360
    %v363 = vsel %vm361, %v358, 0
    %vm365 = vcmask 1041408
    %v367 = vsel %vm365, %v286, 0
    %369 = vmatprep.subr.mxu0 0.0
    %370 = vmatpush1.msra.mxu0 %v367
    %371 = vmatprep.subr.mxu0 0.0
    %372 = vmatpush1.msra.mxu0 0.0
    %373 = vmatprep.subr.mxu0 0.0
    %374 = vmatpush1.msra.mxu0 0.0
    %375 = vmatprep.subr.mxu0 0.0
    %376 = vmatpush1.msra.mxu0 0.0
    %377 = vmatprep.subr.mxu0 0.0
    %378 = vmatpush1.msra.mxu0 0.0
    %379 = vmatprep.subr.mxu0 0.0
    %380 = vmatpush1.msra.mxu0 0.0
    %381 = vmatprep.subr.mxu0 0.0
    %382 = vmatpush1.msra.mxu0 0.0
    %383 = vmatprep.subr.mxu0 0.0
    %384 = vmatpush1.msra.mxu0 0.0
    %385 = vmatprep.subr.mxu0 0.0
    %386 = vmatpush1.msra.mxu0 0.0
    %387 = vmatprep.subr.mxu0 0.0
    %388 = vmatpush1.msra.mxu0 0.0
    %389 = vmatprep.subr.mxu0 0.0
    %390 = vmatpush1.msra.mxu0 0.0
    %391 = vmatprep.subr.mxu0 0.0
    %392 = vmatpush1.msra.mxu0 0.0
    %393 = vmatprep.subr.mxu0 0.0
    %394 = vmatpush1.msra.mxu0 0.0
    %395 = vmatprep.subr.mxu0 0.0
    %396 = vmatpush1.msra.mxu0 0.0
    %397 = vmatprep.subr.mxu0 0.0
    %398 = vmatpush1.msra.mxu0 0.0
    %399 = vmatprep.subr.mxu0 0.0
    %400 = vmatpush1.msra.mxu0 0.0
    %401 = vmatprep.subr.mxu0 0.0
    %402 = vmatpush1.msra.mxu0 0.0
    %403 = vmatprep.subr.mxu0 0.0
    %404 = vmatpush1.msra.mxu0 0.0
    %405 = vmatprep.subr.mxu0 0.0
    %406 = vmatpush1.msra.mxu0 0.0
    %407 = vmatprep.subr.mxu0 0.0
    %408 = vmatpush1.msra.mxu0 0.0
    %409 = vmatprep.subr.mxu0 0.0
    %410 = vmatpush1.msra.mxu0 0.0
    %411 = vmatprep.subr.mxu0 0.0
    %412 = vmatpush1.msra.mxu0 0.0
    %413 = vmatprep.subr.mxu0 0.0
    %414 = vmatpush1.msra.mxu0 0.0
    %415 = vmatprep.subr.mxu0 0.0
    %416 = vmatpush1.msra.mxu0 0.0
    %417 = vmatprep.subr.mxu0 0.0
    %418 = vmatpush1.msra.mxu0 0.0
    %419 = vmatprep.subr.mxu0 0.0
    %420 = vmatpush1.msra.mxu0 0.0
    %421 = vmatprep.subr.mxu0 0.0
    %422 = vmatpush1.msra.mxu0 0.0
    %423 = vmatprep.subr.mxu0 0.0
    %424 = vmatpush1.msra.mxu0 0.0
    %425 = vmatprep.subr.mxu0 0.0
    %426 = vmatpush1.msra.mxu0 0.0
    %427 = vmatprep.subr.mxu0 0.0
    %428 = vmatpush1.msra.mxu0 0.0
    %429 = vmatprep.subr.mxu0 0.0
    %430 = vmatpush1.msra.mxu0 0.0
    %431 = vmatprep.subr.mxu0 0.0
    %432 = vmatpush1.msra.mxu0 0.0
    %433 = vmatprep.mubr.f32.mxu0 0.0
    %434 = vmatmul.mubr.f32.gmra.mrb[0].mxu0 %v363
    %v435 = vpop.f32.mrb[0].mxu0
    %v436 = vadd.f32 0.0, %v435
    %v437 = vpop.f32.mrb[0].mxu0
    %438 = vdwg.mxu0
    %v439 = vsub.f32 %v277, %v436
    %v440 = vmul.f32 %v439, %v439
    %v442 = vsel %vm287, %v440, 0
    %444 = vmatprep.subr.mxu0 0.0
    %445 = vmatpush1.msra.mxu0 %v278
    %446 = vmatprep.subr.mxu0 0.0
    %447 = vmatpush1.msra.mxu0 %v279
    %448 = vmatprep.subr.mxu0 0.0
    %449 = vmatpush1.msra.mxu0 %v280
    %450 = vmatprep.subr.mxu0 0.0
    %451 = vmatpush1.msra.mxu0 %v281
    %452 = vmatprep.subr.mxu0 0.0
    %453 = vmatpush1.msra.mxu0 %v282
    %454 = vmatprep.subr.mxu0 0.0
    %455 = vmatpush1.msra.mxu0 %v283
    %456 = vmatprep.subr.mxu0 0.0
    %457 = vmatpush1.msra.mxu0 %v284
    %458 = vmatprep.subr.mxu0 0.0
    %459 = vmatpush1.msra.mxu0 %v285
    %460 = vmatprep.subr.mxu0 0.0
    %461 = vmatpush1.msra.mxu0 0.0
    %462 = vmatprep.subr.mxu0 0.0
    %463 = vmatpush1.msra.mxu0 0.0
    %464 = vmatprep.subr.mxu0 0.0
    %465 = vmatpush1.msra.mxu0 0.0
    %466 = vmatprep.subr.mxu0 0.0
    %467 = vmatpush1.msra.mxu0 0.0
    %468 = vmatprep.subr.mxu0 0.0
    %469 = vmatpush1.msra.mxu0 0.0
    %470 = vmatprep.subr.mxu0 0.0
    %471 = vmatpush1.msra.mxu0 0.0
    %472 = vmatprep.subr.mxu0 0.0
    %473 = vmatpush1.msra.mxu0 0.0
    %474 = vmatprep.subr.mxu0 0.0
    %475 = vmatpush1.msra.mxu0 0.0
    %476 = vmatprep.subr.mxu0 0.0
    %477 = vmatpush1.msra.mxu0 0.0
    %478 = vmatprep.subr.mxu0 0.0
    %479 = vmatpush1.msra.mxu0 0.0
    %480 = vmatprep.subr.mxu0 0.0
    %481 = vmatpush1.msra.mxu0 0.0
    %482 = vmatprep.subr.mxu0 0.0
    %483 = vmatpush1.msra.mxu0 0.0
    %484 = vmatprep.subr.mxu0 0.0
    %485 = vmatpush1.msra.mxu0 0.0
    %486 = vmatprep.subr.mxu0 0.0
    %487 = vmatpush1.msra.mxu0 0.0
    %488 = vmatprep.subr.mxu0 0.0
    %489 = vmatpush1.msra.mxu0 0.0
    %490 = vmatprep.subr.mxu0 0.0
    %491 = vmatpush1.msra.mxu0 0.0
    %492 = vmatprep.subr.mxu0 0.0
    %493 = vmatpush1.msra.mxu0 0.0
    %494 = vmatprep.subr.mxu0 0.0
    %495 = vmatpush1.msra.mxu0 0.0
    %496 = vmatprep.subr.mxu0 0.0
    %497 = vmatpush1.msra.mxu0 0.0
    %498 = vmatprep.subr.mxu0 0.0
    %499 = vmatpush1.msra.mxu0 0.0
    %500 = vmatprep.subr.mxu0 0.0
    %501 = vmatpush1.msra.mxu0 0.0
    %502 = vmatprep.subr.mxu0 0.0
    %503 = vmatpush1.msra.mxu0 0.0
    %504 = vmatprep.subr.mxu0 0.0
    %505 = vmatpush1.msra.mxu0 0.0
    %506 = vmatprep.subr.mxu0 0.0
    %507 = vmatpush1.msra.mxu0 0.0
    %508 = vmatprep.mubr.f32.mxu0 0.0
    %509 = vmatmul.mubr.f32.gmra.mrb[0].mxu0 %v442
    %v510 = vpop.f32.mrb[0].mxu0
    %v511 = vadd.f32 0.0, %v510
    %v512 = vpop.f32.mrb[0].mxu0
    %513 = vdwg.mxu0
    %v514 = vld [vmem:[%s8] sm:$0x1]
    %v516 = vsel %vm361, %v511, 0
    %518 = vmatprep.subr.mxu0 0.0
    %519 = vmatpush1.msra.mxu0 %v367
    %520 = vmatprep.subr.mxu0 0.0
    %521 = vmatpush1.msra.mxu0 0.0
    %522 = vmatprep.subr.mxu0 0.0
    %523 = vmatpush1.msra.mxu0 0.0
    %524 = vmatprep.subr.mxu0 0.0
    %525 = vmatpush1.msra.mxu0 0.0
    %526 = vmatprep.subr.mxu0 0.0
    %527 = vmatpush1.msra.mxu0 0.0
    %528 = vmatprep.subr.mxu0 0.0
    %529 = vmatpush1.msra.mxu0 0.0
    %530 = vmatprep.subr.mxu0 0.0
    %531 = vmatpush1.msra.mxu0 0.0
    %532 = vmatprep.subr.mxu0 0.0
    %533 = vmatpush1.msra.mxu0 0.0
    %534 = vmatprep.subr.mxu0 0.0
    %535 = vmatpush1.msra.mxu0 0.0
    %536 = vmatprep.subr.mxu0 0.0
    %537 = vmatpush1.msra.mxu0 0.0
    %538 = vmatprep.subr.mxu0 0.0
    %539 = vmatpush1.msra.mxu0 0.0
    %540 = vmatprep.subr.mxu0 0.0
    %541 = vmatpush1.msra.mxu0 0.0
    %542 = vmatprep.subr.mxu0 0.0
    %543 = vmatpush1.msra.mxu0 0.0
    %544 = vmatprep.subr.mxu0 0.0
    %545 = vmatpush1.msra.mxu0 0.0
    %546 = vmatprep.subr.mxu0 0.0
    %547 = vmatpush1.msra.mxu0 0.0
    %548 = vmatprep.subr.mxu0 0.0
    %549 = vmatpush1.msra.mxu0 0.0
    %550 = vmatprep.subr.mxu0 0.0
    %551 = vmatpush1.msra.mxu0 0.0
    %552 = vmatprep.subr.mxu0 0.0
    %553 = vmatpush1.msra.mxu0 0.0
    %554 = vmatprep.subr.mxu0 0.0
    %555 = vmatpush1.msra.mxu0 0.0
    %556 = vmatprep.subr.mxu0 0.0
    %557 = vmatpush1.msra.mxu0 0.0
    %558 = vmatprep.subr.mxu0 0.0
    %559 = vmatpush1.msra.mxu0 0.0
    %560 = vmatprep.subr.mxu0 0.0
    %561 = vmatpush1.msra.mxu0 0.0
    %562 = vmatprep.subr.mxu0 0.0
    %563 = vmatpush1.msra.mxu0 0.0
    %564 = vmatprep.subr.mxu0 0.0
    %565 = vmatpush1.msra.mxu0 0.0
    %566 = vmatprep.subr.mxu0 0.0
    %567 = vmatpush1.msra.mxu0 0.0
    %568 = vmatprep.subr.mxu0 0.0
    %569 = vmatpush1.msra.mxu0 0.0
    %570 = vmatprep.subr.mxu0 0.0
    %571 = vmatpush1.msra.mxu0 0.0
    %572 = vmatprep.subr.mxu0 0.0
    %573 = vmatpush1.msra.mxu0 0.0
    %574 = vmatprep.subr.mxu0 0.0
    %575 = vmatpush1.msra.mxu0 0.0
    %576 = vmatprep.subr.mxu0 0.0
    %577 = vmatpush1.msra.mxu0 0.0
    %578 = vmatprep.subr.mxu0 0.0
    %579 = vmatpush1.msra.mxu0 0.0
    %580 = vmatprep.subr.mxu0 0.0
    %581 = vmatpush1.msra.mxu0 0.0
    %582 = vmatprep.mubr.f32.mxu0 0.0
    %583 = vmatmul.mubr.f32.gmra.mrb[0].mxu0 %v516
    %v584 = vpop.f32.mrb[0].mxu0
    %v585 = vadd.f32 1e-12, %v584
    %v586 = vpop.f32.mrb[0].mxu0
    %587 = vdwg.mxu0
    %v588 = vrsqrt.pop %v585
    %v589 = vmul.f32 %v439, %v588
    %v591 = vlaneseq
    %v592 = vshrl.u32 %v591, 7
    %v593 = vsub.s32 0, %v592
    %v594 = vrot.slane %v514, %v593
    %v596 = vmul.f32 %v594, %v589
    %v597 = vld [vmem:[%s9] sm:$0x1]
    %v599 = vlaneseq
    %v600 = vshrl.u32 %v599, 7
    %v601 = vsub.s32 0, %v600
    %v602 = vrot.slane %v597, %v601
    %v604 = vadd.f32 %v596, %v602
    %605 = vst.msk [vmem:[#allocation2] sm:$0xff] %vm287, %v604
    // Predicated region
    $region42: #{tpu_custom_call.1} parent=1 // pred_check
      _
    $region43: #{tpu_custom_call.1} parent=1 // pred_check_branch
      %607 = sbr.rel (0) target = $region45
    $region44: #{tpu_custom_call.1} parent=1 // pred_region
      %s609 = ssub.s32 128, 128
      %610 = vsyncadd [#allocation3], %s609
      %s612 = sshll.u32 [#allocation2], 4
      %s613 = int_to_ptr.vmem [resolvable:$true] %s612
      %615 = dma.vmem_to_hbm [thread:$0]  %s613, 128, %s10, [#allocation3]
    $region45: #{tpu_custom_call.1} parent=1 // pred_fallthru
      _
    // Predicated region
    $region46: #{tpu_custom_call.1} parent=1 // pred_check
      _
    $region47: #{tpu_custom_call.1} parent=1 // pred_check_branch
      %617 = sbr.rel (0) target = $region49
    $region48: #{tpu_custom_call.1} parent=1 // pred_region
      %618 = dma.done [#allocation3], 128
    $region49: #{tpu_custom_call.1} parent=1 // pred_fallthru
      _
    %619 = vsyncpa [#allocation3], 1

// kernel: tpu_custom_call.1
$region0: #{tpu_custom_call.1}
  #allocation0 [shape = 'u32[]', space=smem, size = 0x4, offset = 0x4, fixed_abs, tag = 'smem constant byte address 0x4 - core index']
  #allocation1 [shape = 'u32[144,128]{1,0:T(1,128)}', space=vmem, size = 0x12000, scoped, tag = 'internal scratch']
  %s0 = inlined_call_operand.vmem [shape: f32[8,64], index: 0, kind: input, shape index: {}]
  %s1 = inlined_call_operand.vmem [shape: f32[16,8], index: 1, kind: input, shape index: {}]
  %s2 = inlined_call_operand.vmem [shape: f32[8,8], index: 2, kind: input, shape index: {}]
  %s3 = inlined_call_operand.vmem [shape: f32[8,8], index: 3, kind: input, shape index: {}]
  %s4 = inlined_call_operand.vmem [shape: f32[8,64], index: 4, kind: input, shape index: {}]
  %s5 = inlined_call_operand.vmem [shape: f32[8,64], index: 5, kind: input, shape index: {}]
  %s6 = inlined_call_operand.vmem [shape: f32[64,2], index: 6, kind: input, shape index: {}]
  %s7 = inlined_call_operand.vmem [shape: f32[2,64], index: 7, kind: input, shape index: {}]
  %s8 = inlined_call_operand.vmem [shape: f32[1,64], index: 8, kind: input, shape index: {}]
  %s9 = inlined_call_operand.vmem [shape: f32[1,64], index: 9, kind: input, shape index: {}]
  %s10 = inlined_call_operand.hbm [shape: f32[8,64], index: 10, kind: output, shape index: {}]
  %s11 = sld [smem:[#allocation0]]
  $region50: #{tpu_custom_call.1} parent=0
    _
  %s13 = ssub.s32 1, %s11
  %s14 = scalar_select 0, %s13, %s11
  $region1: #{tpu_custom_call.1} parent=0
    #allocation2 [shape = 'u8[4096]{0}', space=vmem, size = 0x1000, scoped, tag = 'output window, operand 0, single buffered']
    #allocation3 [shape = 's32[1]{0}', space=sflag, size = 0x4, scoped, tag = 'scoped memory for tpu_custom_call.1']
    %15 = vsyncpa [#allocation3], 0
    // Predicated region
    $region2: #{tpu_custom_call.1} parent=1 // pred_check
      _
    $region3: #{tpu_custom_call.1} parent=1 // pred_check_branch
      %17 = sbr.rel (0) target = $region5
    $region4: #{tpu_custom_call.1} parent=1 // pred_region
      _
    $region5: #{tpu_custom_call.1} parent=1 // pred_fallthru
      _
    // Predicated region
    $region6: #{tpu_custom_call.1} parent=1 // pred_check
      _
    $region7: #{tpu_custom_call.1} parent=1 // pred_check_branch
      %19 = sbr.rel (0) target = $region9
    $region8: #{tpu_custom_call.1} parent=1 // pred_region
      _
    $region9: #{tpu_custom_call.1} parent=1 // pred_fallthru
      _
    // Predicated region
    $region10: #{tpu_custom_call.1} parent=1 // pred_check
      _
    $region11: #{tpu_custom_call.1} parent=1 // pred_check_branch
      %21 = sbr.rel (0) target = $region13
    $region12: #{tpu_custom_call.1} parent=1 // pred_region
      _
    $region13: #{tpu_custom_call.1} parent=1 // pred_fallthru
      _
    // Predicated region
    $region14: #{tpu_custom_call.1} parent=1 // pred_check
      _
    $region15: #{tpu_custom_call.1} parent=1 // pred_check_branch
      %23 = sbr.rel (0) target = $region17
    $region16: #{tpu_custom_call.1} parent=1 // pred_region
      _
    $region17: #{tpu_custom_call.1} parent=1 // pred_fallthru
      _
    // Predicated region
    $region18: #{tpu_custom_call.1} parent=1 // pred_check
      _
    $region19: #{tpu_custom_call.1} parent=1 // pred_check_branch
      %25 = sbr.rel (0) target = $region21
    $region20: #{tpu_custom_call.1} parent=1 // pred_region
      _
    $region21: #{tpu_custom_call.1} parent=1 // pred_fallthru
      _
    // Predicated region
    $region22: #{tpu_custom_call.1} parent=1 // pred_check
      _
    $region23: #{tpu_custom_call.1} parent=1 // pred_check_branch
      %27 = sbr.rel (0) target = $region25
    $region24: #{tpu_custom_call.1} parent=1 // pred_region
      _
    $region25: #{tpu_custom_call.1} parent=1 // pred_fallthru
      _
    // Predicated region
    $region26: #{tpu_custom_call.1} parent=1 // pred_check
      _
    $region27: #{tpu_custom_call.1} parent=1 // pred_check_branch
      %29 = sbr.rel (0) target = $region29
    $region28: #{tpu_custom_call.1} parent=1 // pred_region
      _
    $region29: #{tpu_custom_call.1} parent=1 // pred_fallthru
      _
    // Predicated region
    $region30: #{tpu_custom_call.1} parent=1 // pred_check
      _
    $region31: #{tpu_custom_call.1} parent=1 // pred_check_branch
      %31 = sbr.rel (0) target = $region33
    $region32: #{tpu_custom_call.1} parent=1 // pred_region
      _
    $region33: #{tpu_custom_call.1} parent=1 // pred_fallthru
      _
    // Predicated region
    $region34: #{tpu_custom_call.1} parent=1 // pred_check
      _
    $region35: #{tpu_custom_call.1} parent=1 // pred_check_branch
      %33 = sbr.rel (0) target = $region37
    $region36: #{tpu_custom_call.1} parent=1 // pred_region
      _
    $region37: #{tpu_custom_call.1} parent=1 // pred_fallthru
      _
    // Predicated region
    $region38: #{tpu_custom_call.1} parent=1 // pred_check
      _
    $region39: #{tpu_custom_call.1} parent=1 // pred_check_branch
      %35 = sbr.rel (0) target = $region41
    $region40: #{tpu_custom_call.1} parent=1 // pred_region
      _
    $region41: #{tpu_custom_call.1} parent=1 // pred_fallthru
      _
    %v36 = vld [vmem:[%s0] sm:$0xff]
    %v37 = vld [vmem:[%s1] sm:$0xff]
    %v38 = vld [vmem:[%s1 + $0x8] sm:$0xff]
    %vm39 = vcmask 64512
    %v41 = vsel %vm39, %v37, 0
    %v44 = vsel %vm39, %v38, 0
    %46 = vmatprep.subr.mxu0 0.0
    %47 = vmatpush1.msra.mxu0 %v36
    %48 = vmatprep.subr.mxu0 0.0
    %49 = vmatpush1.msra.mxu0 0.0
    %50 = vmatprep.subr.mxu0 0.0
    %51 = vmatpush1.msra.mxu0 0.0
    %52 = vmatprep.subr.mxu0 0.0
    %53 = vmatpush1.msra.mxu0 0.0
    %54 = vmatprep.subr.mxu0 0.0
    %55 = vmatpush1.msra.mxu0 0.0
    %56 = vmatprep.subr.mxu0 0.0
    %57 = vmatpush1.msra.mxu0 0.0
    %58 = vmatprep.subr.mxu0 0.0
    %59 = vmatpush1.msra.mxu0 0.0
    %60 = vmatprep.subr.mxu0 0.0
    %61 = vmatpush1.msra.mxu0 0.0
    %62 = vmatprep.subr.mxu0 0.0
    %63 = vmatpush1.msra.mxu0 0.0
    %64 = vmatprep.subr.mxu0 0.0
    %65 = vmatpush1.msra.mxu0 0.0
    %66 = vmatprep.subr.mxu0 0.0
    %67 = vmatpush1.msra.mxu0 0.0
    %68 = vmatprep.subr.mxu0 0.0
    %69 = vmatpush1.msra.mxu0 0.0
    %70 = vmatprep.subr.mxu0 0.0
    %71 = vmatpush1.msra.mxu0 0.0
    %72 = vmatprep.subr.mxu0 0.0
    %73 = vmatpush1.msra.mxu0 0.0
    %74 = vmatprep.subr.mxu0 0.0
    %75 = vmatpush1.msra.mxu0 0.0
    %76 = vmatprep.subr.mxu0 0.0
    %77 = vmatpush1.msra.mxu0 0.0
    %78 = vmatprep.subr.mxu0 0.0
    %79 = vmatpush1.msra.mxu0 0.0
    %80 = vmatprep.subr.mxu0 0.0
    %81 = vmatpush1.msra.mxu0 0.0
    %82 = vmatprep.subr.mxu0 0.0
    %83 = vmatpush1.msra.mxu0 0.0
    %84 = vmatprep.subr.mxu0 0.0
    %85 = vmatpush1.msra.mxu0 0.0
    %86 = vmatprep.subr.mxu0 0.0
    %87 = vmatpush1.msra.mxu0 0.0
    %88 = vmatprep.subr.mxu0 0.0
    %89 = vmatpush1.msra.mxu0 0.0
    %90 = vmatprep.subr.mxu0 0.0
    %91 = vmatpush1.msra.mxu0 0.0
    %92 = vmatprep.subr.mxu0 0.0
    %93 = vmatpush1.msra.mxu0 0.0
    %94 = vmatprep.subr.mxu0 0.0
    %95 = vmatpush1.msra.mxu0 0.0
    %96 = vmatprep.subr.mxu0 0.0
    %97 = vmatpush1.msra.mxu0 0.0
    %98 = vmatprep.subr.mxu0 0.0
    %99 = vmatpush1.msra.mxu0 0.0
    %100 = vmatprep.subr.mxu0 0.0
    %101 = vmatpush1.msra.mxu0 0.0
    %102 = vmatprep.subr.mxu0 0.0
    %103 = vmatpush1.msra.mxu0 0.0
    %104 = vmatprep.subr.mxu0 0.0
    %105 = vmatpush1.msra.mxu0 0.0
    %106 = vmatprep.subr.mxu0 0.0
    %107 = vmatpush1.msra.mxu0 0.0
    %108 = vmatprep.subr.mxu0 0.0
    %109 = vmatpush1.msra.mxu0 0.0
    %110 = vmatprep.mubr.f32.mxu0 0.0
    %111 = vmatmul.mubr.f32.gmra.mrb[0].mxu0 %v41
    %v112 = vpop.f32.mrb[0].mxu0
    %v113 = vadd.f32 0.0, %v112
    %v114 = vpop.f32.mrb[0].mxu0
    %115 = vmatprep.mubr.f32.mxu0 0.0
    %116 = vmatmul.mubr.f32.gmra.mrb[0].mxu0 %v44
    %v117 = vpop.f32.mrb[0].mxu0
    %v118 = vadd.f32 0.0, %v117
    %v119 = vpop.f32.mrb[0].mxu0
    %120 = vdwg.mxu0
    %v121 = vld [vmem:[%s4] sm:$0xff]
    %v122 = vld [vmem:[%s5] sm:$0xff]
    %v123 = vmul.f32 %v113, %v121
    %v124 = vmul.f32 %v118, %v122
    %v125 = vsub.f32 %v123, %v124
    %v126 = vmul.f32 %v113, %v122
    %v127 = vmul.f32 %v118, %v121
    %v128 = vadd.f32 %v126, %v127
    %v129 = vld [vmem:[%s2] sm:$0xff]
    %v130 = vld [vmem:[%s3] sm:$0xff]
    %v132 = vsel %vm39, %v130, 0
    %134 = vmatprep.subr.mxu0 0.0
    %135 = vmatpush1.msra.mxu0 %v128
    %136 = vmatprep.subr.mxu0 0.0
    %137 = vmatpush1.msra.mxu0 0.0
    %138 = vmatprep.subr.mxu0 0.0
    %139 = vmatpush1.msra.mxu0 0.0
    %140 = vmatprep.subr.mxu0 0.0
    %141 = vmatpush1.msra.mxu0 0.0
    %142 = vmatprep.subr.mxu0 0.0
    %143 = vmatpush1.msra.mxu0 0.0
    %144 = vmatprep.subr.mxu0 0.0
    %145 = vmatpush1.msra.mxu0 0.0
    %146 = vmatprep.subr.mxu0 0.0
    %147 = vmatpush1.msra.mxu0 0.0
    %148 = vmatprep.subr.mxu0 0.0
    %149 = vmatpush1.msra.mxu0 0.0
    %150 = vmatprep.subr.mxu0 0.0
    %151 = vmatpush1.msra.mxu0 0.0
    %152 = vmatprep.subr.mxu0 0.0
    %153 = vmatpush1.msra.mxu0 0.0
    %154 = vmatprep.subr.mxu0 0.0
    %155 = vmatpush1.msra.mxu0 0.0
    %156 = vmatprep.subr.mxu0 0.0
    %157 = vmatpush1.msra.mxu0 0.0
    %158 = vmatprep.subr.mxu0 0.0
    %159 = vmatpush1.msra.mxu0 0.0
    %160 = vmatprep.subr.mxu0 0.0
    %161 = vmatpush1.msra.mxu0 0.0
    %162 = vmatprep.subr.mxu0 0.0
    %163 = vmatpush1.msra.mxu0 0.0
    %164 = vmatprep.subr.mxu0 0.0
    %165 = vmatpush1.msra.mxu0 0.0
    %166 = vmatprep.subr.mxu0 0.0
    %167 = vmatpush1.msra.mxu0 0.0
    %168 = vmatprep.subr.mxu0 0.0
    %169 = vmatpush1.msra.mxu0 0.0
    %170 = vmatprep.subr.mxu0 0.0
    %171 = vmatpush1.msra.mxu0 0.0
    %172 = vmatprep.subr.mxu0 0.0
    %173 = vmatpush1.msra.mxu0 0.0
    %174 = vmatprep.subr.mxu0 0.0
    %175 = vmatpush1.msra.mxu0 0.0
    %176 = vmatprep.subr.mxu0 0.0
    %177 = vmatpush1.msra.mxu0 0.0
    %178 = vmatprep.subr.mxu0 0.0
    %179 = vmatpush1.msra.mxu0 0.0
    %180 = vmatprep.subr.mxu0 0.0
    %181 = vmatpush1.msra.mxu0 0.0
    %182 = vmatprep.subr.mxu0 0.0
    %183 = vmatpush1.msra.mxu0 0.0
    %184 = vmatprep.subr.mxu0 0.0
    %185 = vmatpush1.msra.mxu0 0.0
    %186 = vmatprep.subr.mxu0 0.0
    %187 = vmatpush1.msra.mxu0 0.0
    %188 = vmatprep.subr.mxu0 0.0
    %189 = vmatpush1.msra.mxu0 0.0
    %190 = vmatprep.subr.mxu0 0.0
    %191 = vmatpush1.msra.mxu0 0.0
    %192 = vmatprep.subr.mxu0 0.0
    %193 = vmatpush1.msra.mxu0 0.0
    %194 = vmatprep.subr.mxu0 0.0
    %195 = vmatpush1.msra.mxu0 0.0
    %196 = vmatprep.subr.mxu0 0.0
    %197 = vmatpush1.msra.mxu0 0.0
    %198 = vmatprep.mubr.f32.mxu0 0.0
    %199 = vmatmul.mubr.f32.gmra.mrb[0].mxu0 %v132
    %v200 = vpop.f32.mrb[0].mxu0
    %v201 = vadd.f32 0.0, %v200
    %v202 = vpop.f32.mrb[0].mxu0
    %203 = vdwg.mxu0
    %v205 = vsel %vm39, %v129, 0
    %207 = vmatprep.subr.mxu0 0.0
    %208 = vmatpush1.msra.mxu0 %v125
    %209 = vmatprep.subr.mxu0 0.0
    %210 = vmatpush1.msra.mxu0 0.0
    %211 = vmatprep.subr.mxu0 0.0
    %212 = vmatpush1.msra.mxu0 0.0
    %213 = vmatprep.subr.mxu0 0.0
    %214 = vmatpush1.msra.mxu0 0.0
    %215 = vmatprep.subr.mxu0 0.0
    %216 = vmatpush1.msra.mxu0 0.0
    %217 = vmatprep.subr.mxu0 0.0
    %218 = vmatpush1.msra.mxu0 0.0
    %219 = vmatprep.subr.mxu0 0.0
    %220 = vmatpush1.msra.mxu0 0.0
    %221 = vmatprep.subr.mxu0 0.0
    %222 = vmatpush1.msra.mxu0 0.0
    %223 = vmatprep.subr.mxu0 0.0
    %224 = vmatpush1.msra.mxu0 0.0
    %225 = vmatprep.subr.mxu0 0.0
    %226 = vmatpush1.msra.mxu0 0.0
    %227 = vmatprep.subr.mxu0 0.0
    %228 = vmatpush1.msra.mxu0 0.0
    %229 = vmatprep.subr.mxu0 0.0
    %230 = vmatpush1.msra.mxu0 0.0
    %231 = vmatprep.subr.mxu0 0.0
    %232 = vmatpush1.msra.mxu0 0.0
    %233 = vmatprep.subr.mxu0 0.0
    %234 = vmatpush1.msra.mxu0 0.0
    %235 = vmatprep.subr.mxu0 0.0
    %236 = vmatpush1.msra.mxu0 0.0
    %237 = vmatprep.subr.mxu0 0.0
    %238 = vmatpush1.msra.mxu0 0.0
    %239 = vmatprep.subr.mxu0 0.0
    %240 = vmatpush1.msra.mxu0 0.0
    %241 = vmatprep.subr.mxu0 0.0
    %242 = vmatpush1.msra.mxu0 0.0
    %243 = vmatprep.subr.mxu0 0.0
    %244 = vmatpush1.msra.mxu0 0.0
    %245 = vmatprep.subr.mxu0 0.0
    %246 = vmatpush1.msra.mxu0 0.0
    %247 = vmatprep.subr.mxu0 0.0
    %248 = vmatpush1.msra.mxu0 0.0
    %249 = vmatprep.subr.mxu0 0.0
    %250 = vmatpush1.msra.mxu0 0.0
    %251 = vmatprep.subr.mxu0 0.0
    %252 = vmatpush1.msra.mxu0 0.0
    %253 = vmatprep.subr.mxu0 0.0
    %254 = vmatpush1.msra.mxu0 0.0
    %255 = vmatprep.subr.mxu0 0.0
    %256 = vmatpush1.msra.mxu0 0.0
    %257 = vmatprep.subr.mxu0 0.0
    %258 = vmatpush1.msra.mxu0 0.0
    %259 = vmatprep.subr.mxu0 0.0
    %260 = vmatpush1.msra.mxu0 0.0
    %261 = vmatprep.subr.mxu0 0.0
    %262 = vmatpush1.msra.mxu0 0.0
    %263 = vmatprep.subr.mxu0 0.0
    %264 = vmatpush1.msra.mxu0 0.0
    %265 = vmatprep.subr.mxu0 0.0
    %266 = vmatpush1.msra.mxu0 0.0
    %267 = vmatprep.subr.mxu0 0.0
    %268 = vmatpush1.msra.mxu0 0.0
    %269 = vmatprep.subr.mxu0 0.0
    %270 = vmatpush1.msra.mxu0 0.0
    %271 = vmatprep.mubr.f32.mxu0 0.0
    %272 = vmatmul.mubr.f32.gmra.mrb[0].mxu0 %v205
    %v273 = vpop.f32.mrb[0].mxu0
    %v274 = vadd.f32 %v201, %v273
    %v275 = vpop.f32.mrb[0].mxu0
    %276 = vdwg.mxu0
    %v277 = vadd.f32 %v274, %v36
    %v278 = vld [vmem:[%s6] sm:$0xff]
    %v279 = vld [vmem:[%s6 + $0x8] sm:$0xff]
    %v280 = vld [vmem:[%s6 + $0x10] sm:$0xff]
    %v281 = vld [vmem:[%s6 + $0x18] sm:$0xff]
    %v282 = vld [vmem:[%s6 + $0x20] sm:$0xff]
    %v283 = vld [vmem:[%s6 + $0x28] sm:$0xff]
    %v284 = vld [vmem:[%s6 + $0x30] sm:$0xff]
    %v285 = vld [vmem:[%s6 + $0x38] sm:$0xff]
    %v286 = vld [vmem:[%s7] sm:$0x3]
    %vm287 = vcmask 523264
    %v289 = vsel %vm287, %v277, 0
    %291 = vmatprep.subr.mxu0 0.0
    %292 = vmatpush1.msra.mxu0 %v278
    %293 = vmatprep.subr.mxu0 0.0
    %294 = vmatpush1.msra.mxu0 %v279
    %295 = vmatprep.subr.mxu0 0.0
    %296 = vmatpush1.msra.mxu0 %v280
    %297 = vmatprep.subr.mxu0 0.0
    %298 = vmatpush1.msra.mxu0 %v281
    %299 = vmatprep.subr.mxu0 0.0
    %300 = vmatpush1.msra.mxu0 %v282
    %301 = vmatprep.subr.mxu0 0.0
    %302 = vmatpush1.msra.mxu0 %v283
    %303 = vmatprep.subr.mxu0 0.0
    %304 = vmatpush1.msra.mxu0 %v284
    %305 = vmatprep.subr.mxu0 0.0
    %306 = vmatpush1.msra.mxu0 %v285
    %307 = vmatprep.subr.mxu0 0.0
    %308 = vmatpush1.msra.mxu0 0.0
    %309 = vmatprep.subr.mxu0 0.0
    %310 = vmatpush1.msra.mxu0 0.0
    %311 = vmatprep.subr.mxu0 0.0
    %312 = vmatpush1.msra.mxu0 0.0
    %313 = vmatprep.subr.mxu0 0.0
    %314 = vmatpush1.msra.mxu0 0.0
    %315 = vmatprep.subr.mxu0 0.0
    %316 = vmatpush1.msra.mxu0 0.0
    %317 = vmatprep.subr.mxu0 0.0
    %318 = vmatpush1.msra.mxu0 0.0
    %319 = vmatprep.subr.mxu0 0.0
    %320 = vmatpush1.msra.mxu0 0.0
    %321 = vmatprep.subr.mxu0 0.0
    %322 = vmatpush1.msra.mxu0 0.0
    %323 = vmatprep.subr.mxu0 0.0
    %324 = vmatpush1.msra.mxu0 0.0
    %325 = vmatprep.subr.mxu0 0.0
    %326 = vmatpush1.msra.mxu0 0.0
    %327 = vmatprep.subr.mxu0 0.0
    %328 = vmatpush1.msra.mxu0 0.0
    %329 = vmatprep.subr.mxu0 0.0
    %330 = vmatpush1.msra.mxu0 0.0
    %331 = vmatprep.subr.mxu0 0.0
    %332 = vmatpush1.msra.mxu0 0.0
    %333 = vmatprep.subr.mxu0 0.0
    %334 = vmatpush1.msra.mxu0 0.0
    %335 = vmatprep.subr.mxu0 0.0
    %336 = vmatpush1.msra.mxu0 0.0
    %337 = vmatprep.subr.mxu0 0.0
    %338 = vmatpush1.msra.mxu0 0.0
    %339 = vmatprep.subr.mxu0 0.0
    %340 = vmatpush1.msra.mxu0 0.0
    %341 = vmatprep.subr.mxu0 0.0
    %342 = vmatpush1.msra.mxu0 0.0
    %343 = vmatprep.subr.mxu0 0.0
    %344 = vmatpush1.msra.mxu0 0.0
    %345 = vmatprep.subr.mxu0 0.0
    %346 = vmatpush1.msra.mxu0 0.0
    %347 = vmatprep.subr.mxu0 0.0
    %348 = vmatpush1.msra.mxu0 0.0
    %349 = vmatprep.subr.mxu0 0.0
    %350 = vmatpush1.msra.mxu0 0.0
    %351 = vmatprep.subr.mxu0 0.0
    %352 = vmatpush1.msra.mxu0 0.0
    %353 = vmatprep.subr.mxu0 0.0
    %354 = vmatpush1.msra.mxu0 0.0
    %355 = vmatprep.mubr.f32.mxu0 0.0
    %356 = vmatmul.mubr.f32.gmra.mrb[0].mxu0 %v289
    %v357 = vpop.f32.mrb[0].mxu0
    %v358 = vadd.f32 0.0, %v357
    %v359 = vpop.f32.mrb[0].mxu0
    %360 = vdwg.mxu0
    %vm361 = vcmask 15360
    %v363 = vsel %vm361, %v358, 0
    %vm365 = vcmask 1041408
    %v367 = vsel %vm365, %v286, 0
    %369 = vmatprep.subr.mxu0 0.0
    %370 = vmatpush1.msra.mxu0 %v367
    %371 = vmatprep.subr.mxu0 0.0
    %372 = vmatpush1.msra.mxu0 0.0
    %373 = vmatprep.subr.mxu0 0.0
    %374 = vmatpush1.msra.mxu0 0.0
    %375 = vmatprep.subr.mxu0 0.0
    %376 = vmatpush1.msra.mxu0 0.0
    %377 = vmatprep.subr.mxu0 0.0
    %378 = vmatpush1.msra.mxu0 0.0
    %379 = vmatprep.subr.mxu0 0.0
    %380 = vmatpush1.msra.mxu0 0.0
    %381 = vmatprep.subr.mxu0 0.0
    %382 = vmatpush1.msra.mxu0 0.0
    %383 = vmatprep.subr.mxu0 0.0
    %384 = vmatpush1.msra.mxu0 0.0
    %385 = vmatprep.subr.mxu0 0.0
    %386 = vmatpush1.msra.mxu0 0.0
    %387 = vmatprep.subr.mxu0 0.0
    %388 = vmatpush1.msra.mxu0 0.0
    %389 = vmatprep.subr.mxu0 0.0
    %390 = vmatpush1.msra.mxu0 0.0
    %391 = vmatprep.subr.mxu0 0.0
    %392 = vmatpush1.msra.mxu0 0.0
    %393 = vmatprep.subr.mxu0 0.0
    %394 = vmatpush1.msra.mxu0 0.0
    %395 = vmatprep.subr.mxu0 0.0
    %396 = vmatpush1.msra.mxu0 0.0
    %397 = vmatprep.subr.mxu0 0.0
    %398 = vmatpush1.msra.mxu0 0.0
    %399 = vmatprep.subr.mxu0 0.0
    %400 = vmatpush1.msra.mxu0 0.0
    %401 = vmatprep.subr.mxu0 0.0
    %402 = vmatpush1.msra.mxu0 0.0
    %403 = vmatprep.subr.mxu0 0.0
    %404 = vmatpush1.msra.mxu0 0.0
    %405 = vmatprep.subr.mxu0 0.0
    %406 = vmatpush1.msra.mxu0 0.0
    %407 = vmatprep.subr.mxu0 0.0
    %408 = vmatpush1.msra.mxu0 0.0
    %409 = vmatprep.subr.mxu0 0.0
    %410 = vmatpush1.msra.mxu0 0.0
    %411 = vmatprep.subr.mxu0 0.0
    %412 = vmatpush1.msra.mxu0 0.0
    %413 = vmatprep.subr.mxu0 0.0
    %414 = vmatpush1.msra.mxu0 0.0
    %415 = vmatprep.subr.mxu0 0.0
    %416 = vmatpush1.msra.mxu0 0.0
    %417 = vmatprep.subr.mxu0 0.0
    %418 = vmatpush1.msra.mxu0 0.0
    %419 = vmatprep.subr.mxu0 0.0
    %420 = vmatpush1.msra.mxu0 0.0
    %421 = vmatprep.subr.mxu0 0.0
    %422 = vmatpush1.msra.mxu0 0.0
    %423 = vmatprep.subr.mxu0 0.0
    %424 = vmatpush1.msra.mxu0 0.0
    %425 = vmatprep.subr.mxu0 0.0
    %426 = vmatpush1.msra.mxu0 0.0
    %427 = vmatprep.subr.mxu0 0.0
    %428 = vmatpush1.msra.mxu0 0.0
    %429 = vmatprep.subr.mxu0 0.0
    %430 = vmatpush1.msra.mxu0 0.0
    %431 = vmatprep.subr.mxu0 0.0
    %432 = vmatpush1.msra.mxu0 0.0
    %433 = vmatprep.mubr.f32.mxu0 0.0
    %434 = vmatmul.mubr.f32.gmra.mrb[0].mxu0 %v363
    %v435 = vpop.f32.mrb[0].mxu0
    %v436 = vadd.f32 0.0, %v435
    %v437 = vpop.f32.mrb[0].mxu0
    %438 = vdwg.mxu0
    %v439 = vsub.f32 %v277, %v436
    %v440 = vmul.f32 %v439, %v439
    %v442 = vsel %vm287, %v440, 0
    %444 = vmatprep.subr.mxu0 0.0
    %445 = vmatpush1.msra.mxu0 %v278
    %446 = vmatprep.subr.mxu0 0.0
    %447 = vmatpush1.msra.mxu0 %v279
    %448 = vmatprep.subr.mxu0 0.0
    %449 = vmatpush1.msra.mxu0 %v280
    %450 = vmatprep.subr.mxu0 0.0
    %451 = vmatpush1.msra.mxu0 %v281
    %452 = vmatprep.subr.mxu0 0.0
    %453 = vmatpush1.msra.mxu0 %v282
    %454 = vmatprep.subr.mxu0 0.0
    %455 = vmatpush1.msra.mxu0 %v283
    %456 = vmatprep.subr.mxu0 0.0
    %457 = vmatpush1.msra.mxu0 %v284
    %458 = vmatprep.subr.mxu0 0.0
    %459 = vmatpush1.msra.mxu0 %v285
    %460 = vmatprep.subr.mxu0 0.0
    %461 = vmatpush1.msra.mxu0 0.0
    %462 = vmatprep.subr.mxu0 0.0
    %463 = vmatpush1.msra.mxu0 0.0
    %464 = vmatprep.subr.mxu0 0.0
    %465 = vmatpush1.msra.mxu0 0.0
    %466 = vmatprep.subr.mxu0 0.0
    %467 = vmatpush1.msra.mxu0 0.0
    %468 = vmatprep.subr.mxu0 0.0
    %469 = vmatpush1.msra.mxu0 0.0
    %470 = vmatprep.subr.mxu0 0.0
    %471 = vmatpush1.msra.mxu0 0.0
    %472 = vmatprep.subr.mxu0 0.0
    %473 = vmatpush1.msra.mxu0 0.0
    %474 = vmatprep.subr.mxu0 0.0
    %475 = vmatpush1.msra.mxu0 0.0
    %476 = vmatprep.subr.mxu0 0.0
    %477 = vmatpush1.msra.mxu0 0.0
    %478 = vmatprep.subr.mxu0 0.0
    %479 = vmatpush1.msra.mxu0 0.0
    %480 = vmatprep.subr.mxu0 0.0
    %481 = vmatpush1.msra.mxu0 0.0
    %482 = vmatprep.subr.mxu0 0.0
    %483 = vmatpush1.msra.mxu0 0.0
    %484 = vmatprep.subr.mxu0 0.0
    %485 = vmatpush1.msra.mxu0 0.0
    %486 = vmatprep.subr.mxu0 0.0
    %487 = vmatpush1.msra.mxu0 0.0
    %488 = vmatprep.subr.mxu0 0.0
    %489 = vmatpush1.msra.mxu0 0.0
    %490 = vmatprep.subr.mxu0 0.0
    %491 = vmatpush1.msra.mxu0 0.0
    %492 = vmatprep.subr.mxu0 0.0
    %493 = vmatpush1.msra.mxu0 0.0
    %494 = vmatprep.subr.mxu0 0.0
    %495 = vmatpush1.msra.mxu0 0.0
    %496 = vmatprep.subr.mxu0 0.0
    %497 = vmatpush1.msra.mxu0 0.0
    %498 = vmatprep.subr.mxu0 0.0
    %499 = vmatpush1.msra.mxu0 0.0
    %500 = vmatprep.subr.mxu0 0.0
    %501 = vmatpush1.msra.mxu0 0.0
    %502 = vmatprep.subr.mxu0 0.0
    %503 = vmatpush1.msra.mxu0 0.0
    %504 = vmatprep.subr.mxu0 0.0
    %505 = vmatpush1.msra.mxu0 0.0
    %506 = vmatprep.subr.mxu0 0.0
    %507 = vmatpush1.msra.mxu0 0.0
    %508 = vmatprep.mubr.f32.mxu0 0.0
    %509 = vmatmul.mubr.f32.gmra.mrb[0].mxu0 %v442
    %v510 = vpop.f32.mrb[0].mxu0
    %v511 = vadd.f32 0.0, %v510
    %v512 = vpop.f32.mrb[0].mxu0
    %513 = vdwg.mxu0
    %v514 = vld [vmem:[%s8] sm:$0x1]
    %v516 = vsel %vm361, %v511, 0
    %518 = vmatprep.subr.mxu0 0.0
    %519 = vmatpush1.msra.mxu0 %v367
    %520 = vmatprep.subr.mxu0 0.0
    %521 = vmatpush1.msra.mxu0 0.0
    %522 = vmatprep.subr.mxu0 0.0
    %523 = vmatpush1.msra.mxu0 0.0
    %524 = vmatprep.subr.mxu0 0.0
    %525 = vmatpush1.msra.mxu0 0.0
    %526 = vmatprep.subr.mxu0 0.0
    %527 = vmatpush1.msra.mxu0 0.0
    %528 = vmatprep.subr.mxu0 0.0
    %529 = vmatpush1.msra.mxu0 0.0
    %530 = vmatprep.subr.mxu0 0.0
    %531 = vmatpush1.msra.mxu0 0.0
    %532 = vmatprep.subr.mxu0 0.0
    %533 = vmatpush1.msra.mxu0 0.0
    %534 = vmatprep.subr.mxu0 0.0
    %535 = vmatpush1.msra.mxu0 0.0
    %536 = vmatprep.subr.mxu0 0.0
    %537 = vmatpush1.msra.mxu0 0.0
    %538 = vmatprep.subr.mxu0 0.0
    %539 = vmatpush1.msra.mxu0 0.0
    %540 = vmatprep.subr.mxu0 0.0
    %541 = vmatpush1.msra.mxu0 0.0
    %542 = vmatprep.subr.mxu0 0.0
    %543 = vmatpush1.msra.mxu0 0.0
    %544 = vmatprep.subr.mxu0 0.0
    %545 = vmatpush1.msra.mxu0 0.0
    %546 = vmatprep.subr.mxu0 0.0
    %547 = vmatpush1.msra.mxu0 0.0
    %548 = vmatprep.subr.mxu0 0.0
    %549 = vmatpush1.msra.mxu0 0.0
    %550 = vmatprep.subr.mxu0 0.0
    %551 = vmatpush1.msra.mxu0 0.0
    %552 = vmatprep.subr.mxu0 0.0
    %553 = vmatpush1.msra.mxu0 0.0
    %554 = vmatprep.subr.mxu0 0.0
    %555 = vmatpush1.msra.mxu0 0.0
    %556 = vmatprep.subr.mxu0 0.0
    %557 = vmatpush1.msra.mxu0 0.0
    %558 = vmatprep.subr.mxu0 0.0
    %559 = vmatpush1.msra.mxu0 0.0
    %560 = vmatprep.subr.mxu0 0.0
    %561 = vmatpush1.msra.mxu0 0.0
    %562 = vmatprep.subr.mxu0 0.0
    %563 = vmatpush1.msra.mxu0 0.0
    %564 = vmatprep.subr.mxu0 0.0
    %565 = vmatpush1.msra.mxu0 0.0
    %566 = vmatprep.subr.mxu0 0.0
    %567 = vmatpush1.msra.mxu0 0.0
    %568 = vmatprep.subr.mxu0 0.0
    %569 = vmatpush1.msra.mxu0 0.0
    %570 = vmatprep.subr.mxu0 0.0
    %571 = vmatpush1.msra.mxu0 0.0
    %572 = vmatprep.subr.mxu0 0.0
    %573 = vmatpush1.msra.mxu0 0.0
    %574 = vmatprep.subr.mxu0 0.0
    %575 = vmatpush1.msra.mxu0 0.0
    %576 = vmatprep.subr.mxu0 0.0
    %577 = vmatpush1.msra.mxu0 0.0
    %578 = vmatprep.subr.mxu0 0.0
    %579 = vmatpush1.msra.mxu0 0.0
    %580 = vmatprep.subr.mxu0 0.0
    %581 = vmatpush1.msra.mxu0 0.0
    %582 = vmatprep.mubr.f32.mxu0 0.0
    %583 = vmatmul.mubr.f32.gmra.mrb[0].mxu0 %v516
    %v584 = vpop.f32.mrb[0].mxu0
    %v585 = vadd.f32 1e-12, %v584
    %v586 = vpop.f32.mrb[0].mxu0
    %587 = vdwg.mxu0
    %v588 = vrsqrt.pop %v585
    %v589 = vmul.f32 %v439, %v588
    %v591 = vlaneseq
    %v592 = vshrl.u32 %v591, 7
    %v593 = vsub.s32 0, %v592
    %v594 = vrot.slane %v514, %v593
    %v596 = vmul.f32 %v594, %v589
    %v597 = vld [vmem:[%s9] sm:$0x1]
    %v599 = vlaneseq
    %v600 = vshrl.u32 %v599, 7
    %v601 = vsub.s32 0, %v600
    %v602 = vrot.slane %v597, %v601
    %v604 = vadd.f32 %v596, %v602
    %605 = vst.msk [vmem:[#allocation2] sm:$0xff] %vm287, %v604
    // Predicated region
    $region42: #{tpu_custom_call.1} parent=1 // pred_check
      _
    $region43: #{tpu_custom_call.1} parent=1 // pred_check_branch
      %607 = sbr.rel (0) target = $region45
    $region44: #{tpu_custom_call.1} parent=1 // pred_region
      %s609 = ssub.s32 128, 128
      %610 = vsyncadd [#allocation3], %s609
      %s612 = sshll.u32 [#allocation2], 4
      %s613 = int_to_ptr.vmem [resolvable:$true] %s612
      %615 = dma.vmem_to_hbm [thread:$0]  %s613, 128, %s10, [#allocation3]
    $region45: #{tpu_custom_call.1} parent=1 // pred_fallthru
      _
    // Predicated region
    $region46: #{tpu_custom_call.1} parent=1 // pred_check
      _
    $region47: #{tpu_custom_call.1} parent=1 // pred_check_branch
      %617 = sbr.rel (0) target = $region49
    $region48: #{tpu_custom_call.1} parent=1 // pred_region
      %618 = dma.done [#allocation3], 128
    $region49: #{tpu_custom_call.1} parent=1 // pred_fallthru
      _
    %619 = vsyncpa [#allocation3], 1

</llo_original>
